<compile_context>
chip_gen: v7x
topology: tpu7x:2x2x1
jax: 0.10.0
libtpu: 0.0.40
codegen_flags: <defaults>
</compile_context>

<pallas_src>
import functools

import jax
import jax.numpy as jnp
from jax import lax
from jax.experimental import pallas as pl
from jax.experimental.pallas import tpu as pltpu


def _round_up(x, m):
    return ((x + m - 1) // m) * m


def _policy_kernel(
    seed_ref,                       # scalar prefetch (SMEM), shape (1,) int32
    obs_ref,                        # (TB, F) f32
    w1_ref, b1_ref,                 # (F, H) bf16, (1, H) f32
    w2_ref, b2_ref,                 # (H, H) bf16, (1, H) f32
    wbr_ref, bbr_ref,               # (H, 2L) bf16, (1, 2L) f32   [Wpi | Wvf]
    wh_ref, bh_ref,                 # (2L, NPAD) bf16, (1, NPAD) f32  block-diag heads
    fv_ref,                         # (TB, 8) f32  packed [action, value, log_prob, 0..]
    *, n_actions, n_pad,
):
    f32 = jnp.float32
    bf16 = jnp.bfloat16
    u32 = jnp.uint32
    tb = fv_ref.shape[0]

    # ---- shared MLP extractor: F -> 128 -> 128 (bf16 MXU, f32 accumulate) ----
    h = jnp.dot(obs_ref[...].astype(bf16), w1_ref[...],
                preferred_element_type=f32) + b1_ref[...]
    h = jnp.maximum(h, 0.0)
    h = jnp.dot(h.astype(bf16), w2_ref[...], preferred_element_type=f32) + b2_ref[...]
    h = jnp.maximum(h, 0.0)

    # ---- fused policy|value branch: 128 -> [lat_pi | lat_vf] (128 wide) ----
    lat = jnp.dot(h.astype(bf16), wbr_ref[...], preferred_element_type=f32) + bbr_ref[...]
    lat = jnp.maximum(lat, 0.0)

    # ---- fused heads (block-diagonal, lane padded): [logits | value | 0..] ----
    head = jnp.dot(lat.astype(bf16), wh_ref[...], preferred_element_type=f32) + bh_ref[...]

    col = lax.broadcasted_iota(jnp.int32, (tb, n_pad), 1)
    neg_inf = jnp.float32(-jnp.inf)
    logits = jnp.where(col < n_actions, head, neg_inf)          # mask padded + value cols
    values = jnp.sum(jnp.where(col == n_actions, head, 0.0), axis=-1, keepdims=True)

    # log-softmax pieces (numerically stable; -inf padded lanes contribute exp()=0)
    m = jnp.max(logits, axis=-1, keepdims=True)
    z = logits - m
    lse = jnp.log(jnp.sum(jnp.exp(z), axis=-1, keepdims=True))

    # ---- in-kernel Gumbel noise via pure-jnp counter hash (no pltpu.prng_*) ----
    row = lax.broadcasted_iota(jnp.int32, (tb, n_pad), 0)
    global_row = row + pl.program_id(0) * tb                    # tile-size independent
    cnt = (global_row * n_pad + col).astype(u32)
    x = cnt ^ (seed_ref[0].astype(u32) * u32(0x9E3779B9))
    x = (x ^ (x >> 16)) * u32(0x7FEB352D)                       # murmur-style finalizer
    x = (x ^ (x >> 15)) * u32(0x846CA68B)
    x = x ^ (x >> 16)
    uni = (x >> 9).astype(jnp.int32).astype(f32) * f32(1.0 / (1 << 23))   # [0,1)
    gumbel = -jnp.log(-jnp.log(jnp.maximum(uni, f32(1e-7))))

    # Categorical sample via Gumbel-max (padded lanes stay -inf, never chosen).
    scores = logits + gumbel
    smax = jnp.max(scores, axis=-1, keepdims=True)
    idx = jnp.min(jnp.where(scores == smax, col, n_pad), axis=-1, keepdims=True)

    # log-prob of the selected lane only (no full logp_all slab kept live).
    z_sel = jnp.sum(jnp.where(col == idx, z, 0.0), axis=-1, keepdims=True)
    logp = z_sel - lse

    # ---- single packed output slab: [action, value, log_prob, 0, ...] ----
    c8 = lax.broadcasted_iota(jnp.int32, fv_ref.shape, 1)
    fv_ref[...] = jnp.where(
        c8 == 0, idx.astype(f32),
        jnp.where(c8 == 1, values,
                  jnp.where(c8 == 2, logp, 0.0)))


def prepare_params(params):
    """Fuse pi/vf branches and the two heads; cast matmul weights to bf16."""
    wpi, wvf = params["wpi"], params["wvf"]
    wa, wv = params["wa"], params["wv"]
    ba, bv = params["ba"], params["bv"]
    latent = wpi.shape[1]
    n_actions = wa.shape[1]
    n_pad = max(128, pl.cdiv(n_actions + 1, 128) * 128)

    # Block-diagonal head: cols [0, A) = action logits, col A = value, rest 0.
    wh = jnp.zeros((2 * latent, n_pad), jnp.float32)
    wh = wh.at[:latent, :n_actions].set(wa)
    wh = wh.at[latent:, n_actions].set(wv[:, 0])
    bh = jnp.zeros((1, n_pad), jnp.float32)
    bh = bh.at[0, :n_actions].set(ba[0])
    bh = bh.at[0, n_actions].set(bv[0, 0])

    bf16 = jnp.bfloat16
    prepped = dict(
        w1=params["w1"].astype(bf16), b1=params["b1"],
        w2=params["w2"].astype(bf16), b2=params["b2"],
        wbr=jnp.concatenate([wpi, wvf], axis=1).astype(bf16),
        bbr=jnp.concatenate([params["bpi"], params["bvf"]], axis=1),
        wh=wh.astype(bf16), bh=bh,
    )
    return prepped, n_actions, n_pad


def _choose_tile(B, tile_b):
    # Keep >= 2 tiles when the batch allows (so v7x's two TensorCores both get
    # work), never exceed tile_b (v5e 16 MiB scoped-VMEM headroom), stay
    # sublane (8) aligned.
    half = _round_up(pl.cdiv(B, 2), 8)
    return max(8, min(tile_b, half))


def actor_critic_forward(obs, seed, p, *, n_actions, n_pad, tile_b=1024):
    """obs: (B, F) f32, seed: (1,) int32, p: prepared params (see prepare_params)."""
    B, F = obs.shape
    tb = _choose_tile(B, tile_b)
    Bp = _round_up(B, tb)
    if Bp != B:
        obs = jnp.pad(obs, ((0, Bp - B), (0, 0)))
    # obs stays f32; the bf16 cast happens inside the kernel (free on the VPU).

    kernel = functools.partial(_policy_kernel, n_actions=n_actions, n_pad=n_pad)

    def const(arr):                           # weights/biases: VMEM-resident across tiles
        return pl.BlockSpec(arr.shape, lambda i, s: (0,) * arr.ndim)

    grid_spec = pltpu.PrefetchScalarGridSpec(
        num_scalar_prefetch=1,
        grid=(Bp // tb,),
        in_specs=[
            pl.BlockSpec((tb, F), lambda i, s: (i, 0)),         # obs batch tile
            const(p["w1"]), const(p["b1"]),
            const(p["w2"]), const(p["b2"]),
            const(p["wbr"]), const(p["bbr"]),
            const(p["wh"]), const(p["bh"]),
        ],
        out_specs=pl.BlockSpec((tb, 8), lambda i, s: (i, 0)),   # [action, value, logp, 0..]
    )

    fv = pl.pallas_call(
        kernel,
        out_shape=jax.ShapeDtypeStruct((Bp, 8), jnp.float32),
        grid_spec=grid_spec,
        compiler_params=pltpu.CompilerParams(
            dimension_semantics=("parallel",),   # v7x: batch tiles across both TCs
        ),
    )(seed, obs, p["w1"], p["b1"], p["w2"], p["b2"],
      p["wbr"], p["bbr"], p["wh"], p["bh"])

    actions = fv[:B, 0].astype(jnp.int32)   # action_space.shape == () -> reshape((-1,))
    values = fv[:B, 1:2]                    # (B, 1), matches value_net output
    log_prob = fv[:B, 2]                    # (B,)
    return actions, values, log_prob


def init_params(key, features_dim, hidden, latent, n_actions):
    """Deterministic synthetic initialization (shapes follow the PyTorch module)."""
    ks = jax.random.split(key, 6)

    def linear(k, fan_in, fan_out):
        w = jax.random.normal(k, (fan_in, fan_out), jnp.float32) * (1.0 / jnp.sqrt(fan_in))
        b = jnp.zeros((1, fan_out), jnp.float32)
        return w, b

    w1, b1 = linear(ks[0], features_dim, hidden)
    w2, b2 = linear(ks[1], hidden, hidden)
    wpi, bpi = linear(ks[2], hidden, latent)
    wvf, bvf = linear(ks[3], hidden, latent)
    wa, ba = linear(ks[4], latent, n_actions)
    wv, bv = linear(ks[5], latent, 1)
    return dict(w1=w1, b1=b1, w2=w2, b2=b2, wpi=wpi, bpi=bpi, wvf=wvf, bvf=bvf,
                wa=wa, ba=ba, wv=wv, bv=bv)


def _reference_forward(obs, params):
    """Pure-JAX f32 reference (no sampling) for a loose numeric check."""
    relu = lambda x: jnp.maximum(x, 0.0)
    h = relu(obs @ params["w1"] + params["b1"])
    h = relu(h @ params["w2"] + params["b2"])
    lat_pi = relu(h @ params["wpi"] + params["bpi"])
    lat_vf = relu(h @ params["wvf"] + params["bvf"])
    logits = lat_pi @ params["wa"] + params["ba"]
    values = lat_vf @ params["wv"] + params["bv"]
    logp_all = jax.nn.log_softmax(logits, axis=-1)
    return values, logp_all


if __name__ == "__main__":
    # obs features=32, net_arch=[128,128], pi/vf heads=[64], Discrete(6) actions.
    # Batch 384 with the auto tile chooser gives 2 grid steps (tile 192) so both
    # the batch grid and the (potential) padding path are exercised.
    B, F, H, L, A = 384, 32, 128, 64, 6

    key = jax.random.PRNGKey(0)
    k_obs, k_par = jax.random.split(key, 2)

    obs = jax.random.normal(k_obs, (B, F), jnp.float32)
    params = init_params(k_par, F, H, L, A)
    prepped, n_actions, n_pad = prepare_params(params)
    seed = jnp.array([1234], dtype=jnp.int32)   # drives in-kernel Gumbel sampling

    fwd = jax.jit(functools.partial(
        actor_critic_forward, n_actions=n_actions, n_pad=n_pad))
    actions, values, log_prob = fwd(obs, seed, prepped)
    jax.block_until_ready((actions, values, log_prob))

    assert actions.shape == (B,) and values.shape == (B, 1) and log_prob.shape == (B,)
    assert int(actions.min()) >= 0 and int(actions.max()) < A
    assert bool(jnp.all(jnp.isfinite(values)))
    assert bool(jnp.all(log_prob <= 1e-5))

    # Loose numeric check against an f32 reference (bf16 matmuls inside kernel).
    ref_values, ref_logp_all = _reference_forward(obs, params)
    ref_logp = ref_logp_all[jnp.arange(B), actions]
    assert bool(jnp.allclose(values, ref_values, atol=0.1))
    assert bool(jnp.allclose(log_prob, ref_logp, atol=0.1))

    print("KERNEL_OK")
</pallas_src>

<mosaic_0001>
module attributes {stable_mosaic.version = 11 : i64} {
  func.func @_policy_kernel(%arg0: i32, %arg1: memref<1xi32, #tpu.memory_space<smem>>, %arg2: memref<192x32xf32, #tpu.memory_space<vmem>>, %arg3: memref<32x128xbf16, #tpu.memory_space<vmem>>, %arg4: memref<1x128xf32, #tpu.memory_space<vmem>>, %arg5: memref<128x128xbf16, #tpu.memory_space<vmem>>, %arg6: memref<1x128xf32, #tpu.memory_space<vmem>>, %arg7: memref<128x128xbf16, #tpu.memory_space<vmem>>, %arg8: memref<1x128xf32, #tpu.memory_space<vmem>>, %arg9: memref<128x128xbf16, #tpu.memory_space<vmem>>, %arg10: memref<1x128xf32, #tpu.memory_space<vmem>>, %arg11: memref<192x8xf32, #tpu.memory_space<vmem>>) attributes {dimension_semantics = [#tpu.dimension_semantics<parallel>], iteration_bounds = array<i64: 2>, scalar_prefetch = 1 : i64, scratch_operands = 0 : i64, tpu.core_type = #tpu.core_type<tc>, window_params = [{transform_indices = @transform_0, window_bounds = array<i64: 192, 32>}, {pipeline_mode = #tpu.pipeline_mode<synchronous>, transform_indices = @transform_1, window_bounds = array<i64: 32, 128>}, {pipeline_mode = #tpu.pipeline_mode<synchronous>, transform_indices = @transform_2, window_bounds = array<i64: 1, 128>}, {pipeline_mode = #tpu.pipeline_mode<synchronous>, transform_indices = @transform_3, window_bounds = array<i64: 128, 128>}, {pipeline_mode = #tpu.pipeline_mode<synchronous>, transform_indices = @transform_4, window_bounds = array<i64: 1, 128>}, {pipeline_mode = #tpu.pipeline_mode<synchronous>, transform_indices = @transform_5, window_bounds = array<i64: 128, 128>}, {pipeline_mode = #tpu.pipeline_mode<synchronous>, transform_indices = @transform_6, window_bounds = array<i64: 1, 128>}, {pipeline_mode = #tpu.pipeline_mode<synchronous>, transform_indices = @transform_7, window_bounds = array<i64: 128, 128>}, {pipeline_mode = #tpu.pipeline_mode<synchronous>, transform_indices = @transform_8, window_bounds = array<i64: 1, 128>}, {transform_indices = @transform_9, window_bounds = array<i64: 192, 8>}]} {
    %c0 = arith.constant 0 : index
    %c0_0 = arith.constant 0 : index
    %0 = vector.load %arg2[%c0, %c0_0] : memref<192x32xf32, #tpu.memory_space<vmem>>, vector<192x32xf32>
    %1 = arith.truncf %0 : vector<192x32xf32> to vector<192x32xbf16>
    %c0_1 = arith.constant 0 : index
    %c0_2 = arith.constant 0 : index
    %2 = vector.load %arg3[%c0_1, %c0_2] : memref<32x128xbf16, #tpu.memory_space<vmem>>, vector<32x128xbf16>
    %cst = arith.constant dense<0.000000e+00> : vector<192x128xf32>
    %3 = tpu.matmul %1, %2, %cst {dimension_numbers = #tpu.dot_dimension_numbers<[1], [0], [0], [1], [0, 0, 1, 1], [], []>} : vector<192x32xbf16>, vector<32x128xbf16>, vector<192x128xf32> -> vector<192x128xf32>
    %c0_3 = arith.constant 0 : index
    %c0_4 = arith.constant 0 : index
    %4 = vector.load %arg4[%c0_3, %c0_4] : memref<1x128xf32, #tpu.memory_space<vmem>>, vector<1x128xf32>
    %5 = vector.broadcast %4 : vector<1x128xf32> to vector<192x128xf32>
    %6 = arith.addf %3, %5 : vector<192x128xf32>
    %cst_5 = arith.constant 0.000000e+00 : f32
    %7 = vector.broadcast %cst_5 : f32 to vector<192x128xf32>
    %8 = arith.maximumf %6, %7 : vector<192x128xf32>
    %9 = arith.truncf %8 : vector<192x128xf32> to vector<192x128xbf16>
    %c0_6 = arith.constant 0 : index
    %c0_7 = arith.constant 0 : index
    %10 = vector.load %arg5[%c0_6, %c0_7] : memref<128x128xbf16, #tpu.memory_space<vmem>>, vector<128x128xbf16>
    %cst_8 = arith.constant dense<0.000000e+00> : vector<192x128xf32>
    %11 = tpu.matmul %9, %10, %cst_8 {dimension_numbers = #tpu.dot_dimension_numbers<[1], [0], [0], [1], [0, 0, 1, 1], [], []>} : vector<192x128xbf16>, vector<128x128xbf16>, vector<192x128xf32> -> vector<192x128xf32>
    %c0_9 = arith.constant 0 : index
    %c0_10 = arith.constant 0 : index
    %12 = vector.load %arg6[%c0_9, %c0_10] : memref<1x128xf32, #tpu.memory_space<vmem>>, vector<1x128xf32>
    %13 = vector.broadcast %12 : vector<1x128xf32> to vector<192x128xf32>
    %14 = arith.addf %11, %13 : vector<192x128xf32>
    %cst_11 = arith.constant 0.000000e+00 : f32
    %15 = vector.broadcast %cst_11 : f32 to vector<192x128xf32>
    %16 = arith.maximumf %14, %15 : vector<192x128xf32>
    %17 = arith.truncf %16 : vector<192x128xf32> to vector<192x128xbf16>
    %c0_12 = arith.constant 0 : index
    %c0_13 = arith.constant 0 : index
    %18 = vector.load %arg7[%c0_12, %c0_13] : memref<128x128xbf16, #tpu.memory_space<vmem>>, vector<128x128xbf16>
    %cst_14 = arith.constant dense<0.000000e+00> : vector<192x128xf32>
    %19 = tpu.matmul %17, %18, %cst_14 {dimension_numbers = #tpu.dot_dimension_numbers<[1], [0], [0], [1], [0, 0, 1, 1], [], []>} : vector<192x128xbf16>, vector<128x128xbf16>, vector<192x128xf32> -> vector<192x128xf32>
    %c0_15 = arith.constant 0 : index
    %c0_16 = arith.constant 0 : index
    %20 = vector.load %arg8[%c0_15, %c0_16] : memref<1x128xf32, #tpu.memory_space<vmem>>, vector<1x128xf32>
    %21 = vector.broadcast %20 : vector<1x128xf32> to vector<192x128xf32>
    %22 = arith.addf %19, %21 : vector<192x128xf32>
    %cst_17 = arith.constant 0.000000e+00 : f32
    %23 = vector.broadcast %cst_17 : f32 to vector<192x128xf32>
    %24 = arith.maximumf %22, %23 : vector<192x128xf32>
    %25 = arith.truncf %24 : vector<192x128xf32> to vector<192x128xbf16>
    %c0_18 = arith.constant 0 : index
    %c0_19 = arith.constant 0 : index
    %26 = vector.load %arg9[%c0_18, %c0_19] : memref<128x128xbf16, #tpu.memory_space<vmem>>, vector<128x128xbf16>
    %cst_20 = arith.constant dense<0.000000e+00> : vector<192x128xf32>
    %27 = tpu.matmul %25, %26, %cst_20 {dimension_numbers = #tpu.dot_dimension_numbers<[1], [0], [0], [1], [0, 0, 1, 1], [], []>} : vector<192x128xbf16>, vector<128x128xbf16>, vector<192x128xf32> -> vector<192x128xf32>
    %c0_21 = arith.constant 0 : index
    %c0_22 = arith.constant 0 : index
    %28 = vector.load %arg10[%c0_21, %c0_22] : memref<1x128xf32, #tpu.memory_space<vmem>>, vector<1x128xf32>
    %29 = vector.broadcast %28 : vector<1x128xf32> to vector<192x128xf32>
    %30 = arith.addf %27, %29 : vector<192x128xf32>
    %31 = tpu.iota {dimensions = array<i32: 1>} : vector<192x128xi32>
    %c6_i32 = arith.constant 6 : i32
    %32 = vector.broadcast %c6_i32 : i32 to vector<192x128xi32>
    %33 = arith.cmpi slt, %31, %32 : vector<192x128xi32>
    %cst_23 = arith.constant 0xFF800000 : f32
    %34 = vector.broadcast %cst_23 : f32 to vector<192x128xf32>
    %35 = arith.select %33, %30, %34 : vector<192x128xi1>, vector<192x128xf32>
    %c6_i32_24 = arith.constant 6 : i32
    %36 = vector.broadcast %c6_i32_24 : i32 to vector<192x128xi32>
    %37 = arith.cmpi eq, %31, %36 : vector<192x128xi32>
    %cst_25 = arith.constant 0.000000e+00 : f32
    %38 = vector.broadcast %cst_25 : f32 to vector<192x128xf32>
    %39 = arith.select %37, %30, %38 : vector<192x128xi1>, vector<192x128xf32>
    %cst_26 = arith.constant dense<0.000000e+00> : vector<192xf32>
    %40 = vector.multi_reduction <add>, %39, %cst_26 [1] : vector<192x128xf32> to vector<192xf32>
    %41 = vector.shape_cast %40 : vector<192xf32> to vector<192x1xf32>
    %cst_27 = arith.constant dense<0xFF800000> : vector<192xf32>
    %42 = vector.multi_reduction <maximumf>, %35, %cst_27 [1] : vector<192x128xf32> to vector<192xf32>
    %43 = vector.shape_cast %42 : vector<192xf32> to vector<192x1xf32>
    %44 = vector.broadcast %43 : vector<192x1xf32> to vector<192x128xf32>
    %45 = arith.subf %35, %44 : vector<192x128xf32>
    %46 = math.exp %45 : vector<192x128xf32>
    %cst_28 = arith.constant dense<0.000000e+00> : vector<192xf32>
    %47 = vector.multi_reduction <add>, %46, %cst_28 [1] : vector<192x128xf32> to vector<192xf32>
    %48 = vector.shape_cast %47 : vector<192xf32> to vector<192x1xf32>
    %49 = math.log %48 : vector<192x1xf32>
    %50 = tpu.iota {dimensions = array<i32: 0>} : vector<192x128xi32>
    %c192_i32 = arith.constant 192 : i32
    %51 = arith.muli %arg0, %c192_i32 : i32
    %52 = vector.broadcast %51 : i32 to vector<192x128xi32>
    %53 = arith.addi %50, %52 : vector<192x128xi32>
    %c128_i32 = arith.constant 128 : i32
    %54 = vector.broadcast %c128_i32 : i32 to vector<192x128xi32>
    %55 = arith.muli %53, %54 : vector<192x128xi32>
    %56 = arith.addi %55, %31 : vector<192x128xi32>
    %c0_29 = arith.constant 0 : index
    %57 = memref.load %arg1[%c0_29] : memref<1xi32, #tpu.memory_space<smem>>
    %c-1640531527_i32 = arith.constant -1640531527 : i32
    %58 = arith.muli %57, %c-1640531527_i32 : i32
    %59 = vector.broadcast %58 : i32 to vector<192x128xi32>
    %60 = arith.xori %56, %59 : vector<192x128xi32>
    %c16_i32 = arith.constant 16 : i32
    %61 = vector.broadcast %c16_i32 : i32 to vector<192x128xi32>
    %62 = arith.shrui %60, %61 : vector<192x128xi32>
    %63 = arith.xori %60, %62 : vector<192x128xi32>
    %c2146121005_i32 = arith.constant 2146121005 : i32
    %64 = vector.broadcast %c2146121005_i32 : i32 to vector<192x128xi32>
    %65 = arith.muli %63, %64 : vector<192x128xi32>
    %c15_i32 = arith.constant 15 : i32
    %66 = vector.broadcast %c15_i32 : i32 to vector<192x128xi32>
    %67 = arith.shrui %65, %66 : vector<192x128xi32>
    %68 = arith.xori %65, %67 : vector<192x128xi32>
    %c-2073254261_i32 = arith.constant -2073254261 : i32
    %69 = vector.broadcast %c-2073254261_i32 : i32 to vector<192x128xi32>
    %70 = arith.muli %68, %69 : vector<192x128xi32>
    %c16_i32_30 = arith.constant 16 : i32
    %71 = vector.broadcast %c16_i32_30 : i32 to vector<192x128xi32>
    %72 = arith.shrui %70, %71 : vector<192x128xi32>
    %73 = arith.xori %70, %72 : vector<192x128xi32>
    %c9_i32 = arith.constant 9 : i32
    %74 = vector.broadcast %c9_i32 : i32 to vector<192x128xi32>
    %75 = arith.shrui %73, %74 : vector<192x128xi32>
    %76 = arith.sitofp %75 : vector<192x128xi32> to vector<192x128xf32>
    %cst_31 = arith.constant 1.1920929E-7 : f32
    %77 = vector.broadcast %cst_31 : f32 to vector<192x128xf32>
    %78 = arith.mulf %76, %77 : vector<192x128xf32>
    %cst_32 = arith.constant 1.000000e-07 : f32
    %79 = vector.broadcast %cst_32 : f32 to vector<192x128xf32>
    %80 = arith.maximumf %78, %79 : vector<192x128xf32>
    %81 = math.log %80 : vector<192x128xf32>
    %cst_33 = arith.constant 0.000000e+00 : f32
    %82 = vector.broadcast %cst_33 : f32 to vector<192x128xf32>
    %83 = arith.subf %82, %81 : vector<192x128xf32>
    %84 = math.log %83 : vector<192x128xf32>
    %cst_34 = arith.constant 0.000000e+00 : f32
    %85 = vector.broadcast %cst_34 : f32 to vector<192x128xf32>
    %86 = arith.subf %85, %84 : vector<192x128xf32>
    %87 = arith.addf %35, %86 : vector<192x128xf32>
    %cst_35 = arith.constant dense<0xFF800000> : vector<192xf32>
    %88 = vector.multi_reduction <maximumf>, %87, %cst_35 [1] : vector<192x128xf32> to vector<192xf32>
    %89 = vector.shape_cast %88 : vector<192xf32> to vector<192x1xf32>
    %90 = vector.broadcast %89 : vector<192x1xf32> to vector<192x128xf32>
    %91 = arith.cmpf oeq, %87, %90 : vector<192x128xf32>
    %c128_i32_36 = arith.constant 128 : i32
    %92 = vector.broadcast %c128_i32_36 : i32 to vector<192x128xi32>
    %93 = arith.select %91, %31, %92 : vector<192x128xi1>, vector<192x128xi32>
    %cst_37 = arith.constant dense<2147483647> : vector<192xi32>
    %94 = vector.multi_reduction <minsi>, %93, %cst_37 [1] : vector<192x128xi32> to vector<192xi32>
    %95 = vector.shape_cast %94 : vector<192xi32> to vector<192x1xi32>
    %96 = vector.broadcast %95 : vector<192x1xi32> to vector<192x128xi32>
    %97 = arith.cmpi eq, %31, %96 : vector<192x128xi32>
    %cst_38 = arith.constant 0.000000e+00 : f32
    %98 = vector.broadcast %cst_38 : f32 to vector<192x128xf32>
    %99 = arith.select %97, %45, %98 : vector<192x128xi1>, vector<192x128xf32>
    %cst_39 = arith.constant dense<0.000000e+00> : vector<192xf32>
    %100 = vector.multi_reduction <add>, %99, %cst_39 [1] : vector<192x128xf32> to vector<192xf32>
    %101 = vector.shape_cast %100 : vector<192xf32> to vector<192x1xf32>
    %102 = arith.subf %101, %49 : vector<192x1xf32>
    %103 = tpu.iota {dimensions = array<i32: 1>} : vector<192x8xi32>
    %c0_i32 = arith.constant 0 : i32
    %104 = vector.broadcast %c0_i32 : i32 to vector<192x8xi32>
    %105 = arith.cmpi eq, %103, %104 : vector<192x8xi32>
    %106 = arith.sitofp %95 : vector<192x1xi32> to vector<192x1xf32>
    %c1_i32 = arith.constant 1 : i32
    %107 = vector.broadcast %c1_i32 : i32 to vector<192x8xi32>
    %108 = arith.cmpi eq, %103, %107 : vector<192x8xi32>
    %c2_i32 = arith.constant 2 : i32
    %109 = vector.broadcast %c2_i32 : i32 to vector<192x8xi32>
    %110 = arith.cmpi eq, %103, %109 : vector<192x8xi32>
    %cst_40 = arith.constant 0.000000e+00 : f32
    %111 = vector.shape_cast %102 : vector<192x1xf32> to vector<192x1xf32>
    %112 = vector.broadcast %111 : vector<192x1xf32> to vector<192x8xf32>
    %113 = vector.broadcast %cst_40 : f32 to vector<192x8xf32>
    %114 = arith.select %110, %112, %113 : vector<192x8xi1>, vector<192x8xf32>
    %115 = vector.shape_cast %41 : vector<192x1xf32> to vector<192x1xf32>
    %116 = vector.broadcast %115 : vector<192x1xf32> to vector<192x8xf32>
    %117 = arith.select %108, %116, %114 : vector<192x8xi1>, vector<192x8xf32>
    %118 = vector.shape_cast %106 : vector<192x1xf32> to vector<192x1xf32>
    %119 = vector.broadcast %118 : vector<192x1xf32> to vector<192x8xf32>
    %120 = arith.select %105, %119, %117 : vector<192x8xi1>, vector<192x8xf32>
    %c0_41 = arith.constant 0 : index
    %c0_42 = arith.constant 0 : index
    %121 = vector.load %arg11[%c0_41, %c0_42] : memref<192x8xf32, #tpu.memory_space<vmem>>, vector<192x8xf32>
    tpu.vector_store %arg11[%c0_41, %c0_42], %120 {strides = array<i32>} : memref<192x8xf32, #tpu.memory_space<vmem>>, vector<192x8xf32>,
    return
  }
  func.func @transform_0(%arg0: i32, %arg1: memref<1xi32, #tpu.memory_space<smem>>) -> (i32, i32) {
    %c0_i32 = arith.constant 0 : i32
    %c0_i32_0 = arith.constant 0 : i32
    return %arg0, %c0_i32 : i32, i32
  }
  func.func @transform_1(%arg0: i32, %arg1: memref<1xi32, #tpu.memory_space<smem>>) -> (i32, i32) {
    %c0_i32 = arith.constant 0 : i32
    %c0_i32_0 = arith.constant 0 : i32
    %c0_i32_1 = arith.constant 0 : i32
    return %c0_i32, %c0_i32_0 : i32, i32
  }
  func.func @transform_2(%arg0: i32, %arg1: memref<1xi32, #tpu.memory_space<smem>>) -> (i32, i32) {
    %c0_i32 = arith.constant 0 : i32
    %c0_i32_0 = arith.constant 0 : i32
    %c0_i32_1 = arith.constant 0 : i32
    return %c0_i32, %c0_i32_0 : i32, i32
  }
  func.func @transform_3(%arg0: i32, %arg1: memref<1xi32, #tpu.memory_space<smem>>) -> (i32, i32) {
    %c0_i32 = arith.constant 0 : i32
    %c0_i32_0 = arith.constant 0 : i32
    %c0_i32_1 = arith.constant 0 : i32
    return %c0_i32, %c0_i32_0 : i32, i32
  }
  func.func @transform_4(%arg0: i32, %arg1: memref<1xi32, #tpu.memory_space<smem>>) -> (i32, i32) {
    %c0_i32 = arith.constant 0 : i32
    %c0_i32_0 = arith.constant 0 : i32
    %c0_i32_1 = arith.constant 0 : i32
    return %c0_i32, %c0_i32_0 : i32, i32
  }
  func.func @transform_5(%arg0: i32, %arg1: memref<1xi32, #tpu.memory_space<smem>>) -> (i32, i32) {
    %c0_i32 = arith.constant 0 : i32
    %c0_i32_0 = arith.constant 0 : i32
    %c0_i32_1 = arith.constant 0 : i32
    return %c0_i32, %c0_i32_0 : i32, i32
  }
  func.func @transform_6(%arg0: i32, %arg1: memref<1xi32, #tpu.memory_space<smem>>) -> (i32, i32) {
    %c0_i32 = arith.constant 0 : i32
    %c0_i32_0 = arith.constant 0 : i32
    %c0_i32_1 = arith.constant 0 : i32
    return %c0_i32, %c0_i32_0 : i32, i32
  }
  func.func @transform_7(%arg0: i32, %arg1: memref<1xi32, #tpu.memory_space<smem>>) -> (i32, i32) {
    %c0_i32 = arith.constant 0 : i32
    %c0_i32_0 = arith.constant 0 : i32
    %c0_i32_1 = arith.constant 0 : i32
    return %c0_i32, %c0_i32_0 : i32, i32
  }
  func.func @transform_8(%arg0: i32, %arg1: memref<1xi32, #tpu.memory_space<smem>>) -> (i32, i32) {
    %c0_i32 = arith.constant 0 : i32
    %c0_i32_0 = arith.constant 0 : i32
    %c0_i32_1 = arith.constant 0 : i32
    return %c0_i32, %c0_i32_0 : i32, i32
  }
  func.func @transform_9(%arg0: i32, %arg1: memref<1xi32, #tpu.memory_space<smem>>) -> (i32, i32) {
    %c0_i32 = arith.constant 0 : i32
    %c0_i32_0 = arith.constant 0 : i32
    return %arg0, %c0_i32 : i32, i32
  }
}

</mosaic_0001>

<llo_original>
// kernel: actor_critic_forward.1
$region0: #{actor_critic_forward.1}
  #allocation0 [shape = 'u32[]', space=smem, size = 0x4, offset = 0x4, fixed_abs, tag = 'smem constant byte address 0x4 - core index']
  #allocation1 [shape = 'u32[144,128]{1,0:T(1,128)}', space=vmem, size = 0x12000, scoped, tag = 'internal scratch']
  #allocation2 [shape = 's32[1]{0}', space=sflag, size = 0x4, scoped, tag = 'scoped memory for actor_critic_forward.1']
  #allocation3 [shape = 's32[1]{0:T(128)S(6)}', space=smem, size = 0x200, scoped, tag = 'prefetched SMEM operand 0']
  %s0 = inlined_call_operand.<no memory space> [shape: s32[1], index: 0, kind: input, shape index: {}]
  %s1 = inlined_call_operand.vmem [shape: f32[384,32], index: 1, kind: input, shape index: {}]
  %s2 = inlined_call_operand.vmem [shape: bf16[32,128], index: 2, kind: input, shape index: {}]
  %s3 = inlined_call_operand.vmem [shape: f32[1,128], index: 3, kind: input, shape index: {}]
  %s4 = inlined_call_operand.vmem [shape: bf16[128,128], index: 4, kind: input, shape index: {}]
  %s5 = inlined_call_operand.vmem [shape: f32[1,128], index: 5, kind: input, shape index: {}]
  %s6 = inlined_call_operand.vmem [shape: bf16[128,128], index: 6, kind: input, shape index: {}]
  %s7 = inlined_call_operand.vmem [shape: f32[1,128], index: 7, kind: input, shape index: {}]
  %s8 = inlined_call_operand.vmem [shape: bf16[128,128], index: 8, kind: input, shape index: {}]
  %s9 = inlined_call_operand.vmem [shape: f32[1,128], index: 9, kind: input, shape index: {}]
  %s10 = inlined_call_operand.vmem [shape: f32[384,8], index: 10, kind: output, shape index: {}]
  %s11 = sld [smem:[#allocation0]]
  $region69: #{actor_critic_forward.1} parent=0
    _
  %s13 = ssub.s32 1, %s11
  %s14 = scalar_select 0, %s13, %s11
  %15 = sst [smem:[#allocation3]] %s0
  loop: start=0, step=1, limit=4
  $region2: #{actor_critic_forward.1} parent=0 // loop_pre_header
    _
  $region3: #{actor_critic_forward.1} parent=0 // loop_header
    %s17 = sphi 0, %s21
    %p18 = scmp.ge.s32.totalorder %s17, 4
    %s27 = sphi 0, %s29
    %s30 = sphi 0, %s27
    %s31 = sphi 0, %s30
    %s47 = sphi 0, %s31
    %s51 = sphi 0, %s51
    %s53 = sphi 0, %s51
    %s54 = sphi 0, %s53
    %s68 = sphi 0, %s54
    %s72 = sphi 0, %s72
    %s74 = sphi 0, %s72
    %s75 = sphi 0, %s74
    %s89 = sphi 0, %s75
    %s93 = sphi 0, %s93
    %s95 = sphi 0, %s93
    %s96 = sphi 0, %s95
    %s110 = sphi 0, %s96
    %s114 = sphi 0, %s114
    %s116 = sphi 0, %s114
    %s117 = sphi 0, %s116
    %s131 = sphi 0, %s117
    %s135 = sphi 0, %s135
    %s137 = sphi 0, %s135
    %s138 = sphi 0, %s137
    %s152 = sphi 0, %s138
    %s156 = sphi 0, %s156
    %s158 = sphi 0, %s156
    %s159 = sphi 0, %s158
    %s173 = sphi 0, %s159
    %s177 = sphi 0, %s177
    %s179 = sphi 0, %s177
    %s180 = sphi 0, %s179
    %s194 = sphi 0, %s180
    %s198 = sphi 0, %s198
    %s200 = sphi 0, %s198
    %s201 = sphi 0, %s200
    %s215 = sphi 0, %s201
    %s221 = sphi 0, %s223
    %s224 = sphi 0, %s221
    %s225 = sphi 0, %s224
    %s241 = sphi 0, %s225
  $region4: #{actor_critic_forward.1} parent=0 // loop_header_branch
    %20 = sbr.rel (%p18) target = $region8
  $region5: #{actor_critic_forward.1} parent=0 // loop_body
    %s22 = ssub.s32 %s17, 1
    %s23 = ssub.s32 %s17, 2
    %s24 = sadd.s32 %s17, 1
    %s25 = ssub.s32 %s17, %s24
    %p26 = scmp.eq.s32.totalorder %s25, 0
    %s28 = sadd.s32 %s27, 1
    %s29 = scalar_select %p26, %s27, %s28
    %p32 = pneg %p26
    %p33 = scmp.eq.s32.totalorder %s17, 1
    %p34 = por %p32, %p33
    %p35 = scmp.ne.s32.totalorder %s27, %s30
    %p36 = scmp.eq.s32.totalorder %s17, 0
    %p37 = por %p35, %p36
    %p38 = scmp.ne.s32.totalorder %s27, %s30
    %p39 = scmp.eq.s32.totalorder %s22, 1
    %p40 = por %p38, %p39
    %p41 = scmp.ne.s32.totalorder %s30, %s31
    %p42 = scmp.eq.s32.totalorder %s22, 0
    %p43 = por %p41, %p42
    %p44 = scmp.ne.s32.totalorder %s30, %s31
    %p45 = scmp.eq.s32.totalorder %s23, 1
    %p46 = por %p44, %p45
    %p48 = scmp.ne.s32.totalorder %s31, %s47
    %p49 = scmp.eq.s32.totalorder %s23, 0
    %p50 = por %p48, %p49
    %s52 = sadd.s32 %s51, 1
    %p55 = scmp.eq.s32.totalorder %s17, 1
    %p56 = scmp.ne.s32.totalorder %s51, %s53
    %p57 = scmp.eq.s32.totalorder %s17, 0
    %p58 = por %p56, %p57
    %p59 = scmp.ne.s32.totalorder %s51, %s53
    %p60 = scmp.eq.s32.totalorder %s22, 1
    %p61 = por %p59, %p60
    %p62 = scmp.ne.s32.totalorder %s53, %s54
    %p63 = scmp.eq.s32.totalorder %s22, 0
    %p64 = por %p62, %p63
    %p65 = scmp.ne.s32.totalorder %s53, %s54
    %p66 = scmp.eq.s32.totalorder %s23, 1
    %p67 = por %p65, %p66
    %p69 = scmp.ne.s32.totalorder %s54, %s68
    %p70 = scmp.eq.s32.totalorder %s23, 0
    %p71 = por %p69, %p70
    %s73 = sadd.s32 %s72, 1
    %p76 = scmp.eq.s32.totalorder %s17, 1
    %p77 = scmp.ne.s32.totalorder %s72, %s74
    %p78 = scmp.eq.s32.totalorder %s17, 0
    %p79 = por %p77, %p78
    %p80 = scmp.ne.s32.totalorder %s72, %s74
    %p81 = scmp.eq.s32.totalorder %s22, 1
    %p82 = por %p80, %p81
    %p83 = scmp.ne.s32.totalorder %s74, %s75
    %p84 = scmp.eq.s32.totalorder %s22, 0
    %p85 = por %p83, %p84
    %p86 = scmp.ne.s32.totalorder %s74, %s75
    %p87 = scmp.eq.s32.totalorder %s23, 1
    %p88 = por %p86, %p87
    %p90 = scmp.ne.s32.totalorder %s75, %s89
    %p91 = scmp.eq.s32.totalorder %s23, 0
    %p92 = por %p90, %p91
    %s94 = sadd.s32 %s93, 1
    %p97 = scmp.eq.s32.totalorder %s17, 1
    %p98 = scmp.ne.s32.totalorder %s93, %s95
    %p99 = scmp.eq.s32.totalorder %s17, 0
    %p100 = por %p98, %p99
    %p101 = scmp.ne.s32.totalorder %s93, %s95
    %p102 = scmp.eq.s32.totalorder %s22, 1
    %p103 = por %p101, %p102
    %p104 = scmp.ne.s32.totalorder %s95, %s96
    %p105 = scmp.eq.s32.totalorder %s22, 0
    %p106 = por %p104, %p105
    %p107 = scmp.ne.s32.totalorder %s95, %s96
    %p108 = scmp.eq.s32.totalorder %s23, 1
    %p109 = por %p107, %p108
    %p111 = scmp.ne.s32.totalorder %s96, %s110
    %p112 = scmp.eq.s32.totalorder %s23, 0
    %p113 = por %p111, %p112
    %s115 = sadd.s32 %s114, 1
    %p118 = scmp.eq.s32.totalorder %s17, 1
    %p119 = scmp.ne.s32.totalorder %s114, %s116
    %p120 = scmp.eq.s32.totalorder %s17, 0
    %p121 = por %p119, %p120
    %p122 = scmp.ne.s32.totalorder %s114, %s116
    %p123 = scmp.eq.s32.totalorder %s22, 1
    %p124 = por %p122, %p123
    %p125 = scmp.ne.s32.totalorder %s116, %s117
    %p126 = scmp.eq.s32.totalorder %s22, 0
    %p127 = por %p125, %p126
    %p128 = scmp.ne.s32.totalorder %s116, %s117
    %p129 = scmp.eq.s32.totalorder %s23, 1
    %p130 = por %p128, %p129
    %p132 = scmp.ne.s32.totalorder %s117, %s131
    %p133 = scmp.eq.s32.totalorder %s23, 0
    %p134 = por %p132, %p133
    %s136 = sadd.s32 %s135, 1
    %p139 = scmp.eq.s32.totalorder %s17, 1
    %p140 = scmp.ne.s32.totalorder %s135, %s137
    %p141 = scmp.eq.s32.totalorder %s17, 0
    %p142 = por %p140, %p141
    %p143 = scmp.ne.s32.totalorder %s135, %s137
    %p144 = scmp.eq.s32.totalorder %s22, 1
    %p145 = por %p143, %p144
    %p146 = scmp.ne.s32.totalorder %s137, %s138
    %p147 = scmp.eq.s32.totalorder %s22, 0
    %p148 = por %p146, %p147
    %p149 = scmp.ne.s32.totalorder %s137, %s138
    %p150 = scmp.eq.s32.totalorder %s23, 1
    %p151 = por %p149, %p150
    %p153 = scmp.ne.s32.totalorder %s138, %s152
    %p154 = scmp.eq.s32.totalorder %s23, 0
    %p155 = por %p153, %p154
    %s157 = sadd.s32 %s156, 1
    %p160 = scmp.eq.s32.totalorder %s17, 1
    %p161 = scmp.ne.s32.totalorder %s156, %s158
    %p162 = scmp.eq.s32.totalorder %s17, 0
    %p163 = por %p161, %p162
    %p164 = scmp.ne.s32.totalorder %s156, %s158
    %p165 = scmp.eq.s32.totalorder %s22, 1
    %p166 = por %p164, %p165
    %p167 = scmp.ne.s32.totalorder %s158, %s159
    %p168 = scmp.eq.s32.totalorder %s22, 0
    %p169 = por %p167, %p168
    %p170 = scmp.ne.s32.totalorder %s158, %s159
    %p171 = scmp.eq.s32.totalorder %s23, 1
    %p172 = por %p170, %p171
    %p174 = scmp.ne.s32.totalorder %s159, %s173
    %p175 = scmp.eq.s32.totalorder %s23, 0
    %p176 = por %p174, %p175
    %s178 = sadd.s32 %s177, 1
    %p181 = scmp.eq.s32.totalorder %s17, 1
    %p182 = scmp.ne.s32.totalorder %s177, %s179
    %p183 = scmp.eq.s32.totalorder %s17, 0
    %p184 = por %p182, %p183
    %p185 = scmp.ne.s32.totalorder %s177, %s179
    %p186 = scmp.eq.s32.totalorder %s22, 1
    %p187 = por %p185, %p186
    %p188 = scmp.ne.s32.totalorder %s179, %s180
    %p189 = scmp.eq.s32.totalorder %s22, 0
    %p190 = por %p188, %p189
    %p191 = scmp.ne.s32.totalorder %s179, %s180
    %p192 = scmp.eq.s32.totalorder %s23, 1
    %p193 = por %p191, %p192
    %p195 = scmp.ne.s32.totalorder %s180, %s194
    %p196 = scmp.eq.s32.totalorder %s23, 0
    %p197 = por %p195, %p196
    %s199 = sadd.s32 %s198, 1
    %p202 = scmp.eq.s32.totalorder %s17, 1
    %p203 = scmp.ne.s32.totalorder %s198, %s200
    %p204 = scmp.eq.s32.totalorder %s17, 0
    %p205 = por %p203, %p204
    %p206 = scmp.ne.s32.totalorder %s198, %s200
    %p207 = scmp.eq.s32.totalorder %s22, 1
    %p208 = por %p206, %p207
    %p209 = scmp.ne.s32.totalorder %s200, %s201
    %p210 = scmp.eq.s32.totalorder %s22, 0
    %p211 = por %p209, %p210
    %p212 = scmp.ne.s32.totalorder %s200, %s201
    %p213 = scmp.eq.s32.totalorder %s23, 1
    %p214 = por %p212, %p213
    %p216 = scmp.ne.s32.totalorder %s201, %s215
    %p217 = scmp.eq.s32.totalorder %s23, 0
    %p218 = por %p216, %p217
    %s219 = ssub.s32 %s17, %s24
    %p220 = scmp.eq.s32.totalorder %s219, 0
    %s222 = sadd.s32 %s221, 1
    %s223 = scalar_select %p220, %s221, %s222
    %p226 = pneg %p220
    %p227 = scmp.eq.s32.totalorder %s17, 1
    %p228 = por %p226, %p227
    %p229 = scmp.ne.s32.totalorder %s221, %s224
    %p230 = scmp.eq.s32.totalorder %s17, 0
    %p231 = por %p229, %p230
    %p232 = scmp.ne.s32.totalorder %s221, %s224
    %p233 = scmp.eq.s32.totalorder %s22, 1
    %p234 = por %p232, %p233
    %p235 = scmp.ne.s32.totalorder %s224, %s225
    %p236 = scmp.eq.s32.totalorder %s22, 0
    %p237 = por %p235, %p236
    %p238 = scmp.ne.s32.totalorder %s224, %s225
    %p239 = scmp.eq.s32.totalorder %s23, 1
    %p240 = por %p238, %p239
    %p242 = scmp.ne.s32.totalorder %s225, %s241
    %p243 = scmp.eq.s32.totalorder %s23, 0
    %p244 = por %p242, %p243
    %p245 = scmp.le.s32.totalorder 1, %s17
    %p246 = scmp.lt.s32.totalorder %s17, 3
    %p247 = pnand %p245, %p246
    %p248 = pneg %p247
    // Predicated region
    $region9: #{actor_critic_forward.1} parent=5 // pred_check
      _
    $region10: #{actor_critic_forward.1} parent=5 // pred_check_branch
      %250 = sbr.rel (%p247) target = $region12
    $region11: #{actor_critic_forward.1} parent=5 // pred_region
      %s251 = ssub.s32 %s17, 1
      // Predicated region
      $region13: #{actor_critic_forward.1} parent=11 // pred_check
        %p252 = pneg %p64
      $region14: #{actor_critic_forward.1} parent=11 // pred_check_branch
        %254 = sbr.rel (%p252) target = $region16
      $region15: #{actor_critic_forward.1} parent=11 // pred_region
        _
      $region16: #{actor_critic_forward.1} parent=11 // pred_fallthru
        _
      // Predicated region
      $region17: #{actor_critic_forward.1} parent=11 // pred_check
        %p255 = pneg %p85
      $region18: #{actor_critic_forward.1} parent=11 // pred_check_branch
        %257 = sbr.rel (%p255) target = $region20
      $region19: #{actor_critic_forward.1} parent=11 // pred_region
        _
      $region20: #{actor_critic_forward.1} parent=11 // pred_fallthru
        _
      // Predicated region
      $region21: #{actor_critic_forward.1} parent=11 // pred_check
        %p258 = pneg %p106
      $region22: #{actor_critic_forward.1} parent=11 // pred_check_branch
        %260 = sbr.rel (%p258) target = $region24
      $region23: #{actor_critic_forward.1} parent=11 // pred_region
        _
      $region24: #{actor_critic_forward.1} parent=11 // pred_fallthru
        _
      // Predicated region
      $region25: #{actor_critic_forward.1} parent=11 // pred_check
        %p261 = pneg %p127
      $region26: #{actor_critic_forward.1} parent=11 // pred_check_branch
        %263 = sbr.rel (%p261) target = $region28
      $region27: #{actor_critic_forward.1} parent=11 // pred_region
        _
      $region28: #{actor_critic_forward.1} parent=11 // pred_fallthru
        _
      // Predicated region
      $region29: #{actor_critic_forward.1} parent=11 // pred_check
        %p264 = pneg %p148
      $region30: #{actor_critic_forward.1} parent=11 // pred_check_branch
        %266 = sbr.rel (%p264) target = $region32
      $region31: #{actor_critic_forward.1} parent=11 // pred_region
        _
      $region32: #{actor_critic_forward.1} parent=11 // pred_fallthru
        _
      // Predicated region
      $region33: #{actor_critic_forward.1} parent=11 // pred_check
        %p267 = pneg %p169
      $region34: #{actor_critic_forward.1} parent=11 // pred_check_branch
        %269 = sbr.rel (%p267) target = $region36
      $region35: #{actor_critic_forward.1} parent=11 // pred_region
        _
      $region36: #{actor_critic_forward.1} parent=11 // pred_fallthru
        _
      // Predicated region
      $region37: #{actor_critic_forward.1} parent=11 // pred_check
        %p270 = pneg %p190
      $region38: #{actor_critic_forward.1} parent=11 // pred_check_branch
        %272 = sbr.rel (%p270) target = $region40
      $region39: #{actor_critic_forward.1} parent=11 // pred_region
        _
      $region40: #{actor_critic_forward.1} parent=11 // pred_fallthru
        _
      // Predicated region
      $region41: #{actor_critic_forward.1} parent=11 // pred_check
        %p273 = pneg %p211
      $region42: #{actor_critic_forward.1} parent=11 // pred_check_branch
        %275 = sbr.rel (%p273) target = $region44
      $region43: #{actor_critic_forward.1} parent=11 // pred_region
        _
      $region44: #{actor_critic_forward.1} parent=11 // pred_fallthru
        _
    $region12: #{actor_critic_forward.1} parent=5 // pred_fallthru
      _
    %p276 = scmp.lt.s32.totalorder %s17, 2
    // Predicated region
    $region45: #{actor_critic_forward.1} parent=5 // pred_check
      %p277 = pneg %p276
    $region46: #{actor_critic_forward.1} parent=5 // pred_check_branch
      %279 = sbr.rel (%p277) target = $region48
    $region47: #{actor_critic_forward.1} parent=5 // pred_region
      // Predicated region
      $region49: #{actor_critic_forward.1} parent=47 // pred_check
        %p280 = pneg %p37
      $region50: #{actor_critic_forward.1} parent=47 // pred_check_branch
        %282 = sbr.rel (%p280) target = $region52
      $region51: #{actor_critic_forward.1} parent=47 // pred_region
        %s283 = smul.u32 24, %s17
        %p284 = scmp.lt.s32.totalorder %s283, 47
        %s285 = scalar_select %p284, %s283, 47
        %s286 = smul.addr %s285, 8
        %s287 = scalar_lea.vmem %s1, %s286
        %s288 = smul.u32 24, %s17
      $region52: #{actor_critic_forward.1} parent=47 // pred_fallthru
        _
    $region48: #{actor_critic_forward.1} parent=5 // pred_fallthru
      _
    %p289 = scmp.le.s32.totalorder 1, %s17
    %p290 = scmp.lt.s32.totalorder %s17, 3
    %p291 = pnand %p289, %p290
    %p292 = pneg %p291
    // Predicated region
    $region53: #{actor_critic_forward.1} parent=5 // pred_check
      _
    $region54: #{actor_critic_forward.1} parent=5 // pred_check_branch
      %294 = sbr.rel (%p291) target = $region56
    $region55: #{actor_critic_forward.1} parent=5 // pred_region
      %s295 = ssub.s32 %s17, 1
      %s296 = smul.u32 24, %s22
      %p297 = scmp.lt.s32.totalorder %s296, 47
      %s298 = scalar_select %p297, %s296, 47
      %s299 = smul.addr %s298, 8
      %s300 = scalar_lea.vmem %s1, %s299
      %p301 = pneg %p43
      %p302 = pneg %p40
      %p303 = pneg %p64
      %p304 = pneg %p61
      %p305 = pneg %p85
      %p306 = pneg %p82
      %p307 = pneg %p106
      %p308 = pneg %p103
      %p309 = pneg %p127
      %p310 = pneg %p124
      %p311 = pneg %p148
      %p312 = pneg %p145
      %p313 = pneg %p169
      %p314 = pneg %p166
      %p315 = pneg %p190
      %p316 = pneg %p187
      %p317 = pneg %p211
      %p318 = pneg %p208
      %p319 = pneg %p237
      %p320 = pneg %p234
      %s321 = smul.u32 24, %s22
      %p322 = scmp.lt.s32.totalorder %s321, 47
      %s323 = scalar_select %p322, %s321, 47
      %s324 = smul.addr %s323, 8
      %s325 = scalar_lea.vmem %s10, %s324
      %s326 = smul.u32 24, %s22
      %p327 = scmp.lt.s32.totalorder %s326, 47
      %s328 = scalar_select %p327, %s326, 47
      %s329 = smul.addr %s328, 8
      %s330 = scalar_lea.vmem %s1, %s329
      %s331 = smul.u32 24, %s22
      %s332 = smul.u32 24, %s22
      %p333 = scmp.lt.s32.totalorder %s332, 47
      %s334 = scalar_select %p333, %s332, 47
      %s335 = smul.addr %s334, 8
      %s336 = scalar_lea.vmem %s10, %s335
      %s337 = smul.u32 24, %s22
      %v339 = vld [vmem:[%s330] sm:$0xff]
      %v340 = vld [vmem:[%s330 + $0x8] sm:$0xff]
      %v341 = vld [vmem:[%s330 + $0x10] sm:$0xff]
      %v342 = vld [vmem:[%s330 + $0x18] sm:$0xff]
      %v343 = vld [vmem:[%s330 + $0x20] sm:$0xff]
      %v344 = vld [vmem:[%s330 + $0x28] sm:$0xff]
      %v345 = vld [vmem:[%s330 + $0x30] sm:$0xff]
      %v346 = vld [vmem:[%s330 + $0x38] sm:$0xff]
      %v347 = vld [vmem:[%s330 + $0x40] sm:$0xff]
      %v348 = vld [vmem:[%s330 + $0x48] sm:$0xff]
      %v349 = vld [vmem:[%s330 + $0x50] sm:$0xff]
      %v350 = vld [vmem:[%s330 + $0x58] sm:$0xff]
      %v351 = vld [vmem:[%s330 + $0x60] sm:$0xff]
      %v352 = vld [vmem:[%s330 + $0x68] sm:$0xff]
      %v353 = vld [vmem:[%s330 + $0x70] sm:$0xff]
      %v354 = vld [vmem:[%s330 + $0x78] sm:$0xff]
      %v355 = vld [vmem:[%s330 + $0x80] sm:$0xff]
      %v356 = vld [vmem:[%s330 + $0x88] sm:$0xff]
      %v357 = vld [vmem:[%s330 + $0x90] sm:$0xff]
      %v358 = vld [vmem:[%s330 + $0x98] sm:$0xff]
      %v359 = vld [vmem:[%s330 + $0xa0] sm:$0xff]
      %v360 = vld [vmem:[%s330 + $0xa8] sm:$0xff]
      %v361 = vld [vmem:[%s330 + $0xb0] sm:$0xff]
      %v362 = vld [vmem:[%s330 + $0xb8] sm:$0xff]
      %v363 = vpack.c.bf16 %v340, %v339
      %v364 = vpack.c.bf16 %v342, %v341
      %v365 = vpack.c.bf16 %v344, %v343
      %v366 = vpack.c.bf16 %v346, %v345
      %v367 = vpack.c.bf16 %v348, %v347
      %v368 = vpack.c.bf16 %v350, %v349
      %v369 = vpack.c.bf16 %v352, %v351
      %v370 = vpack.c.bf16 %v354, %v353
      %v371 = vpack.c.bf16 %v356, %v355
      %v372 = vpack.c.bf16 %v358, %v357
      %v373 = vpack.c.bf16 %v360, %v359
      %v374 = vpack.c.bf16 %v362, %v361
      %v375 = vld [vmem:[%s2] sm:$0xf]
      %v376 = vld [vmem:[%s2 + $0x4] sm:$0xf]
      %v377 = vld [vmem:[%s2 + $0x8] sm:$0xf]
      %v378 = vld [vmem:[%s2 + $0xc] sm:$0xf]
      %v379 = vld [vmem:[%s3] sm:$0x1]
      %v381 = vlaneseq
      %v382 = vshrl.u32 %v381, 7
      %v383 = vsub.s32 0, %v382
      %v384 = vrot.slane %v379, %v383
      %v390 = vunpack.c.l.b16 %v375
      %v391 = vunpack.c.l.b16 %v376
      %v392 = vunpack.c.l.b16 %v377
      %v393 = vunpack.c.l.b16 %v378
      %v394 = vpack.c.b16 %v391, %v390
      %v395 = vpack.c.b16 %v393, %v392
      %vm398 = vcmask 261120
      %v400 = vsel %vm398, %v363, 0
      %v403 = vsel %vm398, %v364, 0
      %v406 = vsel %vm398, %v365, 0
      %v409 = vsel %vm398, %v366, 0
      %v412 = vsel %vm398, %v367, 0
      %v415 = vsel %vm398, %v368, 0
      %v418 = vsel %vm398, %v369, 0
      %v421 = vsel %vm398, %v370, 0
      %v424 = vsel %vm398, %v371, 0
      %v427 = vsel %vm398, %v372, 0
      %v430 = vsel %vm398, %v373, 0
      %v433 = vsel %vm398, %v374, 0
      %435 = vmatprep.subr.bf16.mxu0 0
      %436 = vmatpush1.bf16.msra.mxu0 %v394
      %437 = vmatprep.subr.bf16.mxu0 0
      %438 = vmatpush1.bf16.msra.mxu0 %v395
      %439 = vmatprep.subr.bf16.mxu0 0
      %440 = vmatpush1.bf16.msra.mxu0 0
      %441 = vmatprep.subr.bf16.mxu0 0
      %442 = vmatpush1.bf16.msra.mxu0 0
      %443 = vmatprep.subr.bf16.mxu0 0
      %444 = vmatpush1.bf16.msra.mxu0 0
      %445 = vmatprep.subr.bf16.mxu0 0
      %446 = vmatpush1.bf16.msra.mxu0 0
      %447 = vmatprep.subr.bf16.mxu0 0
      %448 = vmatpush1.bf16.msra.mxu0 0
      %449 = vmatprep.subr.bf16.mxu0 0
      %450 = vmatpush1.bf16.msra.mxu0 0
      %451 = vmatprep.subr.bf16.mxu0 0
      %452 = vmatpush1.bf16.msra.mxu0 0
      %453 = vmatprep.subr.bf16.mxu0 0
      %454 = vmatpush1.bf16.msra.mxu0 0
      %455 = vmatprep.subr.bf16.mxu0 0
      %456 = vmatpush1.bf16.msra.mxu0 0
      %457 = vmatprep.subr.bf16.mxu0 0
      %458 = vmatpush1.bf16.msra.mxu0 0
      %459 = vmatprep.subr.bf16.mxu0 0
      %460 = vmatpush1.bf16.msra.mxu0 0
      %461 = vmatprep.subr.bf16.mxu0 0
      %462 = vmatpush1.bf16.msra.mxu0 0
      %463 = vmatprep.subr.bf16.mxu0 0
      %464 = vmatpush1.bf16.msra.mxu0 0
      %465 = vmatprep.subr.bf16.mxu0 0
      %466 = vmatpush1.bf16.msra.mxu0 0
      %467 = vmatprep.mubr.bf16.mxu0 0
      %468 = vmatmul.mubr.bf16.gmra.mrb[0].mxu0 %v400
      %v469 = vpop.f32.mrb[0].mxu0
      %v470 = vadd.f32 %v384, %v469
      %v471 = vpop.f32.mrb[0].mxu0
      %v472 = vpop.f32.mrb[0].mxu0
      %v473 = vadd.f32 %v384, %v472
      %v474 = vpop.f32.mrb[0].mxu0
      %475 = vmatprep.mubr.bf16.mxu0 0
      %476 = vmatmul.mubr.bf16.gmra.mrb[0].mxu0 %v403
      %v477 = vpop.f32.mrb[0].mxu0
      %v478 = vadd.f32 %v384, %v477
      %v479 = vpop.f32.mrb[0].mxu0
      %v480 = vpop.f32.mrb[0].mxu0
      %v481 = vadd.f32 %v384, %v480
      %v482 = vpop.f32.mrb[0].mxu0
      %483 = vmatprep.mubr.bf16.mxu0 0
      %484 = vmatmul.mubr.bf16.gmra.mrb[0].mxu0 %v406
      %v485 = vpop.f32.mrb[0].mxu0
      %v486 = vadd.f32 %v384, %v485
      %v487 = vpop.f32.mrb[0].mxu0
      %v488 = vpop.f32.mrb[0].mxu0
      %v489 = vadd.f32 %v384, %v488
      %v490 = vpop.f32.mrb[0].mxu0
      %491 = vmatprep.mubr.bf16.mxu0 0
      %492 = vmatmul.mubr.bf16.gmra.mrb[0].mxu0 %v409
      %v493 = vpop.f32.mrb[0].mxu0
      %v494 = vadd.f32 %v384, %v493
      %v495 = vpop.f32.mrb[0].mxu0
      %v496 = vpop.f32.mrb[0].mxu0
      %v497 = vadd.f32 %v384, %v496
      %v498 = vpop.f32.mrb[0].mxu0
      %499 = vmatprep.mubr.bf16.mxu0 0
      %500 = vmatmul.mubr.bf16.gmra.mrb[0].mxu0 %v412
      %v501 = vpop.f32.mrb[0].mxu0
      %v502 = vadd.f32 %v384, %v501
      %v503 = vpop.f32.mrb[0].mxu0
      %v504 = vpop.f32.mrb[0].mxu0
      %v505 = vadd.f32 %v384, %v504
      %v506 = vpop.f32.mrb[0].mxu0
      %507 = vmatprep.mubr.bf16.mxu0 0
      %508 = vmatmul.mubr.bf16.gmra.mrb[0].mxu0 %v415
      %v509 = vpop.f32.mrb[0].mxu0
      %v510 = vadd.f32 %v384, %v509
      %v511 = vpop.f32.mrb[0].mxu0
      %v512 = vpop.f32.mrb[0].mxu0
      %v513 = vadd.f32 %v384, %v512
      %v514 = vpop.f32.mrb[0].mxu0
      %515 = vmatprep.mubr.bf16.mxu0 0
      %516 = vmatmul.mubr.bf16.gmra.mrb[0].mxu0 %v418
      %v517 = vpop.f32.mrb[0].mxu0
      %v518 = vadd.f32 %v384, %v517
      %v519 = vpop.f32.mrb[0].mxu0
      %v520 = vpop.f32.mrb[0].mxu0
      %v521 = vadd.f32 %v384, %v520
      %v522 = vpop.f32.mrb[0].mxu0
      %523 = vmatprep.mubr.bf16.mxu0 0
      %524 = vmatmul.mubr.bf16.gmra.mrb[0].mxu0 %v421
      %v525 = vpop.f32.mrb[0].mxu0
      %v526 = vadd.f32 %v384, %v525
      %v527 = vpop.f32.mrb[0].mxu0
      %v528 = vpop.f32.mrb[0].mxu0
      %v529 = vadd.f32 %v384, %v528
      %v530 = vpop.f32.mrb[0].mxu0
      %531 = vmatprep.mubr.bf16.mxu0 0
      %532 = vmatmul.mubr.bf16.gmra.mrb[0].mxu0 %v424
      %v533 = vpop.f32.mrb[0].mxu0
      %v534 = vadd.f32 %v384, %v533
      %v535 = vpop.f32.mrb[0].mxu0
      %v536 = vpop.f32.mrb[0].mxu0
      %v537 = vadd.f32 %v384, %v536
      %v538 = vpop.f32.mrb[0].mxu0
      %539 = vmatprep.mubr.bf16.mxu0 0
      %540 = vmatmul.mubr.bf16.gmra.mrb[0].mxu0 %v427
      %v541 = vpop.f32.mrb[0].mxu0
      %v542 = vadd.f32 %v384, %v541
      %v543 = vpop.f32.mrb[0].mxu0
      %v544 = vpop.f32.mrb[0].mxu0
      %v545 = vadd.f32 %v384, %v544
      %v546 = vpop.f32.mrb[0].mxu0
      %547 = vmatprep.mubr.bf16.mxu0 0
      %548 = vmatmul.mubr.bf16.gmra.mrb[0].mxu0 %v430
      %v549 = vpop.f32.mrb[0].mxu0
      %v550 = vadd.f32 %v384, %v549
      %v551 = vpop.f32.mrb[0].mxu0
      %v552 = vpop.f32.mrb[0].mxu0
      %v553 = vadd.f32 %v384, %v552
      %v554 = vpop.f32.mrb[0].mxu0
      %555 = vmatprep.mubr.bf16.mxu0 0
      %556 = vmatmul.mubr.bf16.gmra.mrb[0].mxu0 %v433
      %v557 = vpop.f32.mrb[0].mxu0
      %v558 = vadd.f32 %v384, %v557
      %v559 = vpop.f32.mrb[0].mxu0
      %v560 = vpop.f32.mrb[0].mxu0
      %v561 = vadd.f32 %v384, %v560
      %v562 = vpop.f32.mrb[0].mxu0
      %563 = vdwg.mxu0
      %v564 = vmax.f32 %v470, 0.0
      %v565 = vmax.f32 %v473, 0.0
      %v566 = vmax.f32 %v478, 0.0
      %v567 = vmax.f32 %v481, 0.0
      %v568 = vmax.f32 %v486, 0.0
      %v569 = vmax.f32 %v489, 0.0
      %v570 = vmax.f32 %v494, 0.0
      %v571 = vmax.f32 %v497, 0.0
      %v572 = vmax.f32 %v502, 0.0
      %v573 = vmax.f32 %v505, 0.0
      %v574 = vmax.f32 %v510, 0.0
      %v575 = vmax.f32 %v513, 0.0
      %v576 = vmax.f32 %v518, 0.0
      %v577 = vmax.f32 %v521, 0.0
      %v578 = vmax.f32 %v526, 0.0
      %v579 = vmax.f32 %v529, 0.0
      %v580 = vmax.f32 %v534, 0.0
      %v581 = vmax.f32 %v537, 0.0
      %v582 = vmax.f32 %v542, 0.0
      %v583 = vmax.f32 %v545, 0.0
      %v584 = vmax.f32 %v550, 0.0
      %v585 = vmax.f32 %v553, 0.0
      %v586 = vmax.f32 %v558, 0.0
      %v587 = vmax.f32 %v561, 0.0
      %v588 = vpack.c.bf16 %v565, %v564
      %v589 = vpack.c.bf16 %v567, %v566
      %v590 = vpack.c.bf16 %v569, %v568
      %v591 = vpack.c.bf16 %v571, %v570
      %v592 = vpack.c.bf16 %v573, %v572
      %v593 = vpack.c.bf16 %v575, %v574
      %v594 = vpack.c.bf16 %v577, %v576
      %v595 = vpack.c.bf16 %v579, %v578
      %v596 = vpack.c.bf16 %v581, %v580
      %v597 = vpack.c.bf16 %v583, %v582
      %v598 = vpack.c.bf16 %v585, %v584
      %v599 = vpack.c.bf16 %v587, %v586
      %v600 = vld [vmem:[%s4] sm:$0xf]
      %v601 = vld [vmem:[%s4 + $0x4] sm:$0xf]
      %v602 = vld [vmem:[%s4 + $0x8] sm:$0xf]
      %v603 = vld [vmem:[%s4 + $0xc] sm:$0xf]
      %v604 = vld [vmem:[%s4 + $0x10] sm:$0xf]
      %v605 = vld [vmem:[%s4 + $0x14] sm:$0xf]
      %v606 = vld [vmem:[%s4 + $0x18] sm:$0xf]
      %v607 = vld [vmem:[%s4 + $0x1c] sm:$0xf]
      %v608 = vld [vmem:[%s4 + $0x20] sm:$0xf]
      %v609 = vld [vmem:[%s4 + $0x24] sm:$0xf]
      %v610 = vld [vmem:[%s4 + $0x28] sm:$0xf]
      %v611 = vld [vmem:[%s4 + $0x2c] sm:$0xf]
      %v612 = vld [vmem:[%s4 + $0x30] sm:$0xf]
      %v613 = vld [vmem:[%s4 + $0x34] sm:$0xf]
      %v614 = vld [vmem:[%s4 + $0x38] sm:$0xf]
      %v615 = vld [vmem:[%s4 + $0x3c] sm:$0xf]
      %v616 = vld [vmem:[%s5] sm:$0x1]
      %v618 = vlaneseq
      %v619 = vshrl.u32 %v618, 7
      %v620 = vsub.s32 0, %v619
      %v621 = vrot.slane %v616, %v620
      %v639 = vunpack.c.l.b16 %v600
      %v640 = vunpack.c.l.b16 %v601
      %v641 = vunpack.c.l.b16 %v602
      %v642 = vunpack.c.l.b16 %v603
      %v643 = vunpack.c.l.b16 %v604
      %v644 = vunpack.c.l.b16 %v605
      %v645 = vunpack.c.l.b16 %v606
      %v646 = vunpack.c.l.b16 %v607
      %v647 = vunpack.c.l.b16 %v608
      %v648 = vunpack.c.l.b16 %v609
      %v649 = vunpack.c.l.b16 %v610
      %v650 = vunpack.c.l.b16 %v611
      %v651 = vunpack.c.l.b16 %v612
      %v652 = vunpack.c.l.b16 %v613
      %v653 = vunpack.c.l.b16 %v614
      %v654 = vunpack.c.l.b16 %v615
      %v655 = vpack.c.b16 %v640, %v639
      %v656 = vpack.c.b16 %v642, %v641
      %v657 = vpack.c.b16 %v644, %v643
      %v658 = vpack.c.b16 %v646, %v645
      %v659 = vpack.c.b16 %v648, %v647
      %v660 = vpack.c.b16 %v650, %v649
      %v661 = vpack.c.b16 %v652, %v651
      %v662 = vpack.c.b16 %v654, %v653
      %671 = vmatprep.subr.bf16.mxu0 0
      %672 = vmatpush1.bf16.msra.mxu0 %v655
      %673 = vmatprep.subr.bf16.mxu0 0
      %674 = vmatpush1.bf16.msra.mxu0 %v656
      %675 = vmatprep.subr.bf16.mxu0 0
      %676 = vmatpush1.bf16.msra.mxu0 %v657
      %677 = vmatprep.subr.bf16.mxu0 0
      %678 = vmatpush1.bf16.msra.mxu0 %v658
      %679 = vmatprep.subr.bf16.mxu0 0
      %680 = vmatpush1.bf16.msra.mxu0 %v659
      %681 = vmatprep.subr.bf16.mxu0 0
      %682 = vmatpush1.bf16.msra.mxu0 %v660
      %683 = vmatprep.subr.bf16.mxu0 0
      %684 = vmatpush1.bf16.msra.mxu0 %v661
      %685 = vmatprep.subr.bf16.mxu0 0
      %686 = vmatpush1.bf16.msra.mxu0 %v662
      %687 = vmatprep.subr.bf16.mxu0 0
      %688 = vmatpush1.bf16.msra.mxu0 0
      %689 = vmatprep.subr.bf16.mxu0 0
      %690 = vmatpush1.bf16.msra.mxu0 0
      %691 = vmatprep.subr.bf16.mxu0 0
      %692 = vmatpush1.bf16.msra.mxu0 0
      %693 = vmatprep.subr.bf16.mxu0 0
      %694 = vmatpush1.bf16.msra.mxu0 0
      %695 = vmatprep.subr.bf16.mxu0 0
      %696 = vmatpush1.bf16.msra.mxu0 0
      %697 = vmatprep.subr.bf16.mxu0 0
      %698 = vmatpush1.bf16.msra.mxu0 0
      %699 = vmatprep.subr.bf16.mxu0 0
      %700 = vmatpush1.bf16.msra.mxu0 0
      %701 = vmatprep.subr.bf16.mxu0 0
      %702 = vmatpush1.bf16.msra.mxu0 0
      %703 = vmatprep.mubr.bf16.mxu0 0
      %704 = vmatmul.mubr.bf16.gmra.mrb[0].mxu0 %v588
      %v705 = vpop.f32.mrb[0].mxu0
      %v706 = vadd.f32 %v621, %v705
      %v707 = vpop.f32.mrb[0].mxu0
      %v708 = vpop.f32.mrb[0].mxu0
      %v709 = vadd.f32 %v621, %v708
      %v710 = vpop.f32.mrb[0].mxu0
      %711 = vmatprep.mubr.bf16.mxu0 0
      %712 = vmatmul.mubr.bf16.gmra.mrb[0].mxu0 %v589
      %v713 = vpop.f32.mrb[0].mxu0
      %v714 = vadd.f32 %v621, %v713
      %v715 = vpop.f32.mrb[0].mxu0
      %v716 = vpop.f32.mrb[0].mxu0
      %v717 = vadd.f32 %v621, %v716
      %v718 = vpop.f32.mrb[0].mxu0
      %719 = vmatprep.mubr.bf16.mxu0 0
      %720 = vmatmul.mubr.bf16.gmra.mrb[0].mxu0 %v590
      %v721 = vpop.f32.mrb[0].mxu0
      %v722 = vadd.f32 %v621, %v721
      %v723 = vpop.f32.mrb[0].mxu0
      %v724 = vpop.f32.mrb[0].mxu0
      %v725 = vadd.f32 %v621, %v724
      %v726 = vpop.f32.mrb[0].mxu0
      %727 = vmatprep.mubr.bf16.mxu0 0
      %728 = vmatmul.mubr.bf16.gmra.mrb[0].mxu0 %v591
      %v729 = vpop.f32.mrb[0].mxu0
      %v730 = vadd.f32 %v621, %v729
      %v731 = vpop.f32.mrb[0].mxu0
      %v732 = vpop.f32.mrb[0].mxu0
      %v733 = vadd.f32 %v621, %v732
      %v734 = vpop.f32.mrb[0].mxu0
      %735 = vmatprep.mubr.bf16.mxu0 0
      %736 = vmatmul.mubr.bf16.gmra.mrb[0].mxu0 %v592
      %v737 = vpop.f32.mrb[0].mxu0
      %v738 = vadd.f32 %v621, %v737
      %v739 = vpop.f32.mrb[0].mxu0
      %v740 = vpop.f32.mrb[0].mxu0
      %v741 = vadd.f32 %v621, %v740
      %v742 = vpop.f32.mrb[0].mxu0
      %743 = vmatprep.mubr.bf16.mxu0 0
      %744 = vmatmul.mubr.bf16.gmra.mrb[0].mxu0 %v593
      %v745 = vpop.f32.mrb[0].mxu0
      %v746 = vadd.f32 %v621, %v745
      %v747 = vpop.f32.mrb[0].mxu0
      %v748 = vpop.f32.mrb[0].mxu0
      %v749 = vadd.f32 %v621, %v748
      %v750 = vpop.f32.mrb[0].mxu0
      %751 = vmatprep.mubr.bf16.mxu0 0
      %752 = vmatmul.mubr.bf16.gmra.mrb[0].mxu0 %v594
      %v753 = vpop.f32.mrb[0].mxu0
      %v754 = vadd.f32 %v621, %v753
      %v755 = vpop.f32.mrb[0].mxu0
      %v756 = vpop.f32.mrb[0].mxu0
      %v757 = vadd.f32 %v621, %v756
      %v758 = vpop.f32.mrb[0].mxu0
      %759 = vmatprep.mubr.bf16.mxu0 0
      %760 = vmatmul.mubr.bf16.gmra.mrb[0].mxu0 %v595
      %v761 = vpop.f32.mrb[0].mxu0
      %v762 = vadd.f32 %v621, %v761
      %v763 = vpop.f32.mrb[0].mxu0
      %v764 = vpop.f32.mrb[0].mxu0
      %v765 = vadd.f32 %v621, %v764
      %v766 = vpop.f32.mrb[0].mxu0
      %767 = vmatprep.mubr.bf16.mxu0 0
      %768 = vmatmul.mubr.bf16.gmra.mrb[0].mxu0 %v596
      %v769 = vpop.f32.mrb[0].mxu0
      %v770 = vadd.f32 %v621, %v769
      %v771 = vpop.f32.mrb[0].mxu0
      %v772 = vpop.f32.mrb[0].mxu0
      %v773 = vadd.f32 %v621, %v772
      %v774 = vpop.f32.mrb[0].mxu0
      %775 = vmatprep.mubr.bf16.mxu0 0
      %776 = vmatmul.mubr.bf16.gmra.mrb[0].mxu0 %v597
      %v777 = vpop.f32.mrb[0].mxu0
      %v778 = vadd.f32 %v621, %v777
      %v779 = vpop.f32.mrb[0].mxu0
      %v780 = vpop.f32.mrb[0].mxu0
      %v781 = vadd.f32 %v621, %v780
      %v782 = vpop.f32.mrb[0].mxu0
      %783 = vmatprep.mubr.bf16.mxu0 0
      %784 = vmatmul.mubr.bf16.gmra.mrb[0].mxu0 %v598
      %v785 = vpop.f32.mrb[0].mxu0
      %v786 = vadd.f32 %v621, %v785
      %v787 = vpop.f32.mrb[0].mxu0
      %v788 = vpop.f32.mrb[0].mxu0
      %v789 = vadd.f32 %v621, %v788
      %v790 = vpop.f32.mrb[0].mxu0
      %791 = vmatprep.mubr.bf16.mxu0 0
      %792 = vmatmul.mubr.bf16.gmra.mrb[0].mxu0 %v599
      %v793 = vpop.f32.mrb[0].mxu0
      %v794 = vadd.f32 %v621, %v793
      %v795 = vpop.f32.mrb[0].mxu0
      %v796 = vpop.f32.mrb[0].mxu0
      %v797 = vadd.f32 %v621, %v796
      %v798 = vpop.f32.mrb[0].mxu0
      %799 = vdwg.mxu0
      %v800 = vmax.f32 %v706, 0.0
      %v801 = vmax.f32 %v709, 0.0
      %v802 = vmax.f32 %v714, 0.0
      %v803 = vmax.f32 %v717, 0.0
      %v804 = vmax.f32 %v722, 0.0
      %v805 = vmax.f32 %v725, 0.0
      %v806 = vmax.f32 %v730, 0.0
      %v807 = vmax.f32 %v733, 0.0
      %v808 = vmax.f32 %v738, 0.0
      %v809 = vmax.f32 %v741, 0.0
      %v810 = vmax.f32 %v746, 0.0
      %v811 = vmax.f32 %v749, 0.0
      %v812 = vmax.f32 %v754, 0.0
      %v813 = vmax.f32 %v757, 0.0
      %v814 = vmax.f32 %v762, 0.0
      %v815 = vmax.f32 %v765, 0.0
      %v816 = vmax.f32 %v770, 0.0
      %v817 = vmax.f32 %v773, 0.0
      %v818 = vmax.f32 %v778, 0.0
      %v819 = vmax.f32 %v781, 0.0
      %v820 = vmax.f32 %v786, 0.0
      %v821 = vmax.f32 %v789, 0.0
      %v822 = vmax.f32 %v794, 0.0
      %v823 = vmax.f32 %v797, 0.0
      %v824 = vpack.c.bf16 %v801, %v800
      %v825 = vpack.c.bf16 %v803, %v802
      %v826 = vpack.c.bf16 %v805, %v804
      %v827 = vpack.c.bf16 %v807, %v806
      %v828 = vpack.c.bf16 %v809, %v808
      %v829 = vpack.c.bf16 %v811, %v810
      %v830 = vpack.c.bf16 %v813, %v812
      %v831 = vpack.c.bf16 %v815, %v814
      %v832 = vpack.c.bf16 %v817, %v816
      %v833 = vpack.c.bf16 %v819, %v818
      %v834 = vpack.c.bf16 %v821, %v820
      %v835 = vpack.c.bf16 %v823, %v822
      %v836 = vld [vmem:[%s6] sm:$0xf]
      %v837 = vld [vmem:[%s6 + $0x4] sm:$0xf]
      %v838 = vld [vmem:[%s6 + $0x8] sm:$0xf]
      %v839 = vld [vmem:[%s6 + $0xc] sm:$0xf]
      %v840 = vld [vmem:[%s6 + $0x10] sm:$0xf]
      %v841 = vld [vmem:[%s6 + $0x14] sm:$0xf]
      %v842 = vld [vmem:[%s6 + $0x18] sm:$0xf]
      %v843 = vld [vmem:[%s6 + $0x1c] sm:$0xf]
      %v844 = vld [vmem:[%s6 + $0x20] sm:$0xf]
      %v845 = vld [vmem:[%s6 + $0x24] sm:$0xf]
      %v846 = vld [vmem:[%s6 + $0x28] sm:$0xf]
      %v847 = vld [vmem:[%s6 + $0x2c] sm:$0xf]
      %v848 = vld [vmem:[%s6 + $0x30] sm:$0xf]
      %v849 = vld [vmem:[%s6 + $0x34] sm:$0xf]
      %v850 = vld [vmem:[%s6 + $0x38] sm:$0xf]
      %v851 = vld [vmem:[%s6 + $0x3c] sm:$0xf]
      %v852 = vld [vmem:[%s7] sm:$0x1]
      %v854 = vlaneseq
      %v855 = vshrl.u32 %v854, 7
      %v856 = vsub.s32 0, %v855
      %v857 = vrot.slane %v852, %v856
      %v875 = vunpack.c.l.b16 %v836
      %v876 = vunpack.c.l.b16 %v837
      %v877 = vunpack.c.l.b16 %v838
      %v878 = vunpack.c.l.b16 %v839
      %v879 = vunpack.c.l.b16 %v840
      %v880 = vunpack.c.l.b16 %v841
      %v881 = vunpack.c.l.b16 %v842
      %v882 = vunpack.c.l.b16 %v843
      %v883 = vunpack.c.l.b16 %v844
      %v884 = vunpack.c.l.b16 %v845
      %v885 = vunpack.c.l.b16 %v846
      %v886 = vunpack.c.l.b16 %v847
      %v887 = vunpack.c.l.b16 %v848
      %v888 = vunpack.c.l.b16 %v849
      %v889 = vunpack.c.l.b16 %v850
      %v890 = vunpack.c.l.b16 %v851
      %v891 = vpack.c.b16 %v876, %v875
      %v892 = vpack.c.b16 %v878, %v877
      %v893 = vpack.c.b16 %v880, %v879
      %v894 = vpack.c.b16 %v882, %v881
      %v895 = vpack.c.b16 %v884, %v883
      %v896 = vpack.c.b16 %v886, %v885
      %v897 = vpack.c.b16 %v888, %v887
      %v898 = vpack.c.b16 %v890, %v889
      %907 = vmatprep.subr.bf16.mxu0 0
      %908 = vmatpush1.bf16.msra.mxu0 %v891
      %909 = vmatprep.subr.bf16.mxu0 0
      %910 = vmatpush1.bf16.msra.mxu0 %v892
      %911 = vmatprep.subr.bf16.mxu0 0
      %912 = vmatpush1.bf16.msra.mxu0 %v893
      %913 = vmatprep.subr.bf16.mxu0 0
      %914 = vmatpush1.bf16.msra.mxu0 %v894
      %915 = vmatprep.subr.bf16.mxu0 0
      %916 = vmatpush1.bf16.msra.mxu0 %v895
      %917 = vmatprep.subr.bf16.mxu0 0
      %918 = vmatpush1.bf16.msra.mxu0 %v896
      %919 = vmatprep.subr.bf16.mxu0 0
      %920 = vmatpush1.bf16.msra.mxu0 %v897
      %921 = vmatprep.subr.bf16.mxu0 0
      %922 = vmatpush1.bf16.msra.mxu0 %v898
      %923 = vmatprep.subr.bf16.mxu0 0
      %924 = vmatpush1.bf16.msra.mxu0 0
      %925 = vmatprep.subr.bf16.mxu0 0
      %926 = vmatpush1.bf16.msra.mxu0 0
      %927 = vmatprep.subr.bf16.mxu0 0
      %928 = vmatpush1.bf16.msra.mxu0 0
      %929 = vmatprep.subr.bf16.mxu0 0
      %930 = vmatpush1.bf16.msra.mxu0 0
      %931 = vmatprep.subr.bf16.mxu0 0
      %932 = vmatpush1.bf16.msra.mxu0 0
      %933 = vmatprep.subr.bf16.mxu0 0
      %934 = vmatpush1.bf16.msra.mxu0 0
      %935 = vmatprep.subr.bf16.mxu0 0
      %936 = vmatpush1.bf16.msra.mxu0 0
      %937 = vmatprep.subr.bf16.mxu0 0
      %938 = vmatpush1.bf16.msra.mxu0 0
      %939 = vmatprep.mubr.bf16.mxu0 0
      %940 = vmatmul.mubr.bf16.gmra.mrb[0].mxu0 %v824
      %v941 = vpop.f32.mrb[0].mxu0
      %v942 = vadd.f32 %v857, %v941
      %v943 = vpop.f32.mrb[0].mxu0
      %v944 = vpop.f32.mrb[0].mxu0
      %v945 = vadd.f32 %v857, %v944
      %v946 = vpop.f32.mrb[0].mxu0
      %947 = vmatprep.mubr.bf16.mxu0 0
      %948 = vmatmul.mubr.bf16.gmra.mrb[0].mxu0 %v825
      %v949 = vpop.f32.mrb[0].mxu0
      %v950 = vadd.f32 %v857, %v949
      %v951 = vpop.f32.mrb[0].mxu0
      %v952 = vpop.f32.mrb[0].mxu0
      %v953 = vadd.f32 %v857, %v952
      %v954 = vpop.f32.mrb[0].mxu0
      %955 = vmatprep.mubr.bf16.mxu0 0
      %956 = vmatmul.mubr.bf16.gmra.mrb[0].mxu0 %v826
      %v957 = vpop.f32.mrb[0].mxu0
      %v958 = vadd.f32 %v857, %v957
      %v959 = vpop.f32.mrb[0].mxu0
      %v960 = vpop.f32.mrb[0].mxu0
      %v961 = vadd.f32 %v857, %v960
      %v962 = vpop.f32.mrb[0].mxu0
      %963 = vmatprep.mubr.bf16.mxu0 0
      %964 = vmatmul.mubr.bf16.gmra.mrb[0].mxu0 %v827
      %v965 = vpop.f32.mrb[0].mxu0
      %v966 = vadd.f32 %v857, %v965
      %v967 = vpop.f32.mrb[0].mxu0
      %v968 = vpop.f32.mrb[0].mxu0
      %v969 = vadd.f32 %v857, %v968
      %v970 = vpop.f32.mrb[0].mxu0
      %971 = vmatprep.mubr.bf16.mxu0 0
      %972 = vmatmul.mubr.bf16.gmra.mrb[0].mxu0 %v828
      %v973 = vpop.f32.mrb[0].mxu0
      %v974 = vadd.f32 %v857, %v973
      %v975 = vpop.f32.mrb[0].mxu0
      %v976 = vpop.f32.mrb[0].mxu0
      %v977 = vadd.f32 %v857, %v976
      %v978 = vpop.f32.mrb[0].mxu0
      %979 = vmatprep.mubr.bf16.mxu0 0
      %980 = vmatmul.mubr.bf16.gmra.mrb[0].mxu0 %v829
      %v981 = vpop.f32.mrb[0].mxu0
      %v982 = vadd.f32 %v857, %v981
      %v983 = vpop.f32.mrb[0].mxu0
      %v984 = vpop.f32.mrb[0].mxu0
      %v985 = vadd.f32 %v857, %v984
      %v986 = vpop.f32.mrb[0].mxu0
      %987 = vmatprep.mubr.bf16.mxu0 0
      %988 = vmatmul.mubr.bf16.gmra.mrb[0].mxu0 %v830
      %v989 = vpop.f32.mrb[0].mxu0
      %v990 = vadd.f32 %v857, %v989
      %v991 = vpop.f32.mrb[0].mxu0
      %v992 = vpop.f32.mrb[0].mxu0
      %v993 = vadd.f32 %v857, %v992
      %v994 = vpop.f32.mrb[0].mxu0
      %995 = vmatprep.mubr.bf16.mxu0 0
      %996 = vmatmul.mubr.bf16.gmra.mrb[0].mxu0 %v831
      %v997 = vpop.f32.mrb[0].mxu0
      %v998 = vadd.f32 %v857, %v997
      %v999 = vpop.f32.mrb[0].mxu0
      %v1000 = vpop.f32.mrb[0].mxu0
      %v1001 = vadd.f32 %v857, %v1000
      %v1002 = vpop.f32.mrb[0].mxu0
      %1003 = vmatprep.mubr.bf16.mxu0 0
      %1004 = vmatmul.mubr.bf16.gmra.mrb[0].mxu0 %v832
      %v1005 = vpop.f32.mrb[0].mxu0
      %v1006 = vadd.f32 %v857, %v1005
      %v1007 = vpop.f32.mrb[0].mxu0
      %v1008 = vpop.f32.mrb[0].mxu0
      %v1009 = vadd.f32 %v857, %v1008
      %v1010 = vpop.f32.mrb[0].mxu0
      %1011 = vmatprep.mubr.bf16.mxu0 0
      %1012 = vmatmul.mubr.bf16.gmra.mrb[0].mxu0 %v833
      %v1013 = vpop.f32.mrb[0].mxu0
      %v1014 = vadd.f32 %v857, %v1013
      %v1015 = vpop.f32.mrb[0].mxu0
      %v1016 = vpop.f32.mrb[0].mxu0
      %v1017 = vadd.f32 %v857, %v1016
      %v1018 = vpop.f32.mrb[0].mxu0
      %1019 = vmatprep.mubr.bf16.mxu0 0
      %1020 = vmatmul.mubr.bf16.gmra.mrb[0].mxu0 %v834
      %v1021 = vpop.f32.mrb[0].mxu0
      %v1022 = vadd.f32 %v857, %v1021
      %v1023 = vpop.f32.mrb[0].mxu0
      %v1024 = vpop.f32.mrb[0].mxu0
      %v1025 = vadd.f32 %v857, %v1024
      %v1026 = vpop.f32.mrb[0].mxu0
      %1027 = vmatprep.mubr.bf16.mxu0 0
      %1028 = vmatmul.mubr.bf16.gmra.mrb[0].mxu0 %v835
      %v1029 = vpop.f32.mrb[0].mxu0
      %v1030 = vadd.f32 %v857, %v1029
      %v1031 = vpop.f32.mrb[0].mxu0
      %v1032 = vpop.f32.mrb[0].mxu0
      %v1033 = vadd.f32 %v857, %v1032
      %v1034 = vpop.f32.mrb[0].mxu0
      %1035 = vdwg.mxu0
      %v1036 = vmax.f32 %v942, 0.0
      %v1037 = vmax.f32 %v945, 0.0
      %v1038 = vmax.f32 %v950, 0.0
      %v1039 = vmax.f32 %v953, 0.0
      %v1040 = vmax.f32 %v958, 0.0
      %v1041 = vmax.f32 %v961, 0.0
      %v1042 = vmax.f32 %v966, 0.0
      %v1043 = vmax.f32 %v969, 0.0
      %v1044 = vmax.f32 %v974, 0.0
      %v1045 = vmax.f32 %v977, 0.0
      %v1046 = vmax.f32 %v982, 0.0
      %v1047 = vmax.f32 %v985, 0.0
      %v1048 = vmax.f32 %v990, 0.0
      %v1049 = vmax.f32 %v993, 0.0
      %v1050 = vmax.f32 %v998, 0.0
      %v1051 = vmax.f32 %v1001, 0.0
      %v1052 = vmax.f32 %v1006, 0.0
      %v1053 = vmax.f32 %v1009, 0.0
      %v1054 = vmax.f32 %v1014, 0.0
      %v1055 = vmax.f32 %v1017, 0.0
      %v1056 = vmax.f32 %v1022, 0.0
      %v1057 = vmax.f32 %v1025, 0.0
      %v1058 = vmax.f32 %v1030, 0.0
      %v1059 = vmax.f32 %v1033, 0.0
      %v1060 = vpack.c.bf16 %v1037, %v1036
      %v1061 = vpack.c.bf16 %v1039, %v1038
      %v1062 = vpack.c.bf16 %v1041, %v1040
      %v1063 = vpack.c.bf16 %v1043, %v1042
      %v1064 = vpack.c.bf16 %v1045, %v1044
      %v1065 = vpack.c.bf16 %v1047, %v1046
      %v1066 = vpack.c.bf16 %v1049, %v1048
      %v1067 = vpack.c.bf16 %v1051, %v1050
      %v1068 = vpack.c.bf16 %v1053, %v1052
      %v1069 = vpack.c.bf16 %v1055, %v1054
      %v1070 = vpack.c.bf16 %v1057, %v1056
      %v1071 = vpack.c.bf16 %v1059, %v1058
      %v1072 = vld [vmem:[%s8] sm:$0xf]
      %v1073 = vld [vmem:[%s8 + $0x4] sm:$0xf]
      %v1074 = vld [vmem:[%s8 + $0x8] sm:$0xf]
      %v1075 = vld [vmem:[%s8 + $0xc] sm:$0xf]
      %v1076 = vld [vmem:[%s8 + $0x10] sm:$0xf]
      %v1077 = vld [vmem:[%s8 + $0x14] sm:$0xf]
      %v1078 = vld [vmem:[%s8 + $0x18] sm:$0xf]
      %v1079 = vld [vmem:[%s8 + $0x1c] sm:$0xf]
      %v1080 = vld [vmem:[%s8 + $0x20] sm:$0xf]
      %v1081 = vld [vmem:[%s8 + $0x24] sm:$0xf]
      %v1082 = vld [vmem:[%s8 + $0x28] sm:$0xf]
      %v1083 = vld [vmem:[%s8 + $0x2c] sm:$0xf]
      %v1084 = vld [vmem:[%s8 + $0x30] sm:$0xf]
      %v1085 = vld [vmem:[%s8 + $0x34] sm:$0xf]
      %v1086 = vld [vmem:[%s8 + $0x38] sm:$0xf]
      %v1087 = vld [vmem:[%s8 + $0x3c] sm:$0xf]
      %v1088 = vld [vmem:[%s9] sm:$0x1]
      %v1090 = vlaneseq
      %v1091 = vshrl.u32 %v1090, 7
      %v1092 = vsub.s32 0, %v1091
      %v1093 = vrot.slane %v1088, %v1092
      %v1111 = vunpack.c.l.b16 %v1072
      %v1112 = vunpack.c.l.b16 %v1073
      %v1113 = vunpack.c.l.b16 %v1074
      %v1114 = vunpack.c.l.b16 %v1075
      %v1115 = vunpack.c.l.b16 %v1076
      %v1116 = vunpack.c.l.b16 %v1077
      %v1117 = vunpack.c.l.b16 %v1078
      %v1118 = vunpack.c.l.b16 %v1079
      %v1119 = vunpack.c.l.b16 %v1080
      %v1120 = vunpack.c.l.b16 %v1081
      %v1121 = vunpack.c.l.b16 %v1082
      %v1122 = vunpack.c.l.b16 %v1083
      %v1123 = vunpack.c.l.b16 %v1084
      %v1124 = vunpack.c.l.b16 %v1085
      %v1125 = vunpack.c.l.b16 %v1086
      %v1126 = vunpack.c.l.b16 %v1087
      %v1127 = vpack.c.b16 %v1112, %v1111
      %v1128 = vpack.c.b16 %v1114, %v1113
      %v1129 = vpack.c.b16 %v1116, %v1115
      %v1130 = vpack.c.b16 %v1118, %v1117
      %v1131 = vpack.c.b16 %v1120, %v1119
      %v1132 = vpack.c.b16 %v1122, %v1121
      %v1133 = vpack.c.b16 %v1124, %v1123
      %v1134 = vpack.c.b16 %v1126, %v1125
      %1143 = vmatprep.subr.bf16.mxu0 0
      %1144 = vmatpush1.bf16.msra.mxu0 %v1127
      %1145 = vmatprep.subr.bf16.mxu0 0
      %1146 = vmatpush1.bf16.msra.mxu0 %v1128
      %1147 = vmatprep.subr.bf16.mxu0 0
      %1148 = vmatpush1.bf16.msra.mxu0 %v1129
      %1149 = vmatprep.subr.bf16.mxu0 0
      %1150 = vmatpush1.bf16.msra.mxu0 %v1130
      %1151 = vmatprep.subr.bf16.mxu0 0
      %1152 = vmatpush1.bf16.msra.mxu0 %v1131
      %1153 = vmatprep.subr.bf16.mxu0 0
      %1154 = vmatpush1.bf16.msra.mxu0 %v1132
      %1155 = vmatprep.subr.bf16.mxu0 0
      %1156 = vmatpush1.bf16.msra.mxu0 %v1133
      %1157 = vmatprep.subr.bf16.mxu0 0
      %1158 = vmatpush1.bf16.msra.mxu0 %v1134
      %1159 = vmatprep.subr.bf16.mxu0 0
      %1160 = vmatpush1.bf16.msra.mxu0 0
      %1161 = vmatprep.subr.bf16.mxu0 0
      %1162 = vmatpush1.bf16.msra.mxu0 0
      %1163 = vmatprep.subr.bf16.mxu0 0
      %1164 = vmatpush1.bf16.msra.mxu0 0
      %1165 = vmatprep.subr.bf16.mxu0 0
      %1166 = vmatpush1.bf16.msra.mxu0 0
      %1167 = vmatprep.subr.bf16.mxu0 0
      %1168 = vmatpush1.bf16.msra.mxu0 0
      %1169 = vmatprep.subr.bf16.mxu0 0
      %1170 = vmatpush1.bf16.msra.mxu0 0
      %1171 = vmatprep.subr.bf16.mxu0 0
      %1172 = vmatpush1.bf16.msra.mxu0 0
      %1173 = vmatprep.subr.bf16.mxu0 0
      %1174 = vmatpush1.bf16.msra.mxu0 0
      %1175 = vmatprep.mubr.bf16.mxu0 0
      %1176 = vmatmul.mubr.bf16.gmra.mrb[0].mxu0 %v1060
      %v1177 = vpop.f32.mrb[0].mxu0
      %v1178 = vadd.f32 %v1093, %v1177
      %v1179 = vpop.f32.mrb[0].mxu0
      %v1180 = vpop.f32.mrb[0].mxu0
      %v1181 = vadd.f32 %v1093, %v1180
      %v1182 = vpop.f32.mrb[0].mxu0
      %1183 = vmatprep.mubr.bf16.mxu0 0
      %1184 = vmatmul.mubr.bf16.gmra.mrb[0].mxu0 %v1061
      %v1185 = vpop.f32.mrb[0].mxu0
      %v1186 = vadd.f32 %v1093, %v1185
      %v1187 = vpop.f32.mrb[0].mxu0
      %v1188 = vpop.f32.mrb[0].mxu0
      %v1189 = vadd.f32 %v1093, %v1188
      %v1190 = vpop.f32.mrb[0].mxu0
      %1191 = vmatprep.mubr.bf16.mxu0 0
      %1192 = vmatmul.mubr.bf16.gmra.mrb[0].mxu0 %v1062
      %v1193 = vpop.f32.mrb[0].mxu0
      %v1194 = vadd.f32 %v1093, %v1193
      %v1195 = vpop.f32.mrb[0].mxu0
      %v1196 = vpop.f32.mrb[0].mxu0
      %v1197 = vadd.f32 %v1093, %v1196
      %v1198 = vpop.f32.mrb[0].mxu0
      %1199 = vmatprep.mubr.bf16.mxu0 0
      %1200 = vmatmul.mubr.bf16.gmra.mrb[0].mxu0 %v1063
      %v1201 = vpop.f32.mrb[0].mxu0
      %v1202 = vadd.f32 %v1093, %v1201
      %v1203 = vpop.f32.mrb[0].mxu0
      %v1204 = vpop.f32.mrb[0].mxu0
      %v1205 = vadd.f32 %v1093, %v1204
      %v1206 = vpop.f32.mrb[0].mxu0
      %1207 = vmatprep.mubr.bf16.mxu0 0
      %1208 = vmatmul.mubr.bf16.gmra.mrb[0].mxu0 %v1064
      %v1209 = vpop.f32.mrb[0].mxu0
      %v1210 = vadd.f32 %v1093, %v1209
      %v1211 = vpop.f32.mrb[0].mxu0
      %v1212 = vpop.f32.mrb[0].mxu0
      %v1213 = vadd.f32 %v1093, %v1212
      %v1214 = vpop.f32.mrb[0].mxu0
      %1215 = vmatprep.mubr.bf16.mxu0 0
      %1216 = vmatmul.mubr.bf16.gmra.mrb[0].mxu0 %v1065
      %v1217 = vpop.f32.mrb[0].mxu0
      %v1218 = vadd.f32 %v1093, %v1217
      %v1219 = vpop.f32.mrb[0].mxu0
      %v1220 = vpop.f32.mrb[0].mxu0
      %v1221 = vadd.f32 %v1093, %v1220
      %v1222 = vpop.f32.mrb[0].mxu0
      %1223 = vmatprep.mubr.bf16.mxu0 0
      %1224 = vmatmul.mubr.bf16.gmra.mrb[0].mxu0 %v1066
      %v1225 = vpop.f32.mrb[0].mxu0
      %v1226 = vadd.f32 %v1093, %v1225
      %v1227 = vpop.f32.mrb[0].mxu0
      %v1228 = vpop.f32.mrb[0].mxu0
      %v1229 = vadd.f32 %v1093, %v1228
      %v1230 = vpop.f32.mrb[0].mxu0
      %1231 = vmatprep.mubr.bf16.mxu0 0
      %1232 = vmatmul.mubr.bf16.gmra.mrb[0].mxu0 %v1067
      %v1233 = vpop.f32.mrb[0].mxu0
      %v1234 = vadd.f32 %v1093, %v1233
      %v1235 = vpop.f32.mrb[0].mxu0
      %v1236 = vpop.f32.mrb[0].mxu0
      %v1237 = vadd.f32 %v1093, %v1236
      %v1238 = vpop.f32.mrb[0].mxu0
      %1239 = vmatprep.mubr.bf16.mxu0 0
      %1240 = vmatmul.mubr.bf16.gmra.mrb[0].mxu0 %v1068
      %v1241 = vpop.f32.mrb[0].mxu0
      %v1242 = vadd.f32 %v1093, %v1241
      %v1243 = vpop.f32.mrb[0].mxu0
      %v1244 = vpop.f32.mrb[0].mxu0
      %v1245 = vadd.f32 %v1093, %v1244
      %v1246 = vpop.f32.mrb[0].mxu0
      %1247 = vmatprep.mubr.bf16.mxu0 0
      %1248 = vmatmul.mubr.bf16.gmra.mrb[0].mxu0 %v1069
      %v1249 = vpop.f32.mrb[0].mxu0
      %v1250 = vadd.f32 %v1093, %v1249
      %v1251 = vpop.f32.mrb[0].mxu0
      %v1252 = vpop.f32.mrb[0].mxu0
      %v1253 = vadd.f32 %v1093, %v1252
      %v1254 = vpop.f32.mrb[0].mxu0
      %1255 = vmatprep.mubr.bf16.mxu0 0
      %1256 = vmatmul.mubr.bf16.gmra.mrb[0].mxu0 %v1070
      %v1257 = vpop.f32.mrb[0].mxu0
      %v1258 = vadd.f32 %v1093, %v1257
      %v1259 = vpop.f32.mrb[0].mxu0
      %v1260 = vpop.f32.mrb[0].mxu0
      %v1261 = vadd.f32 %v1093, %v1260
      %v1262 = vpop.f32.mrb[0].mxu0
      %1263 = vmatprep.mubr.bf16.mxu0 0
      %1264 = vmatmul.mubr.bf16.gmra.mrb[0].mxu0 %v1071
      %v1265 = vpop.f32.mrb[0].mxu0
      %v1266 = vadd.f32 %v1093, %v1265
      %v1267 = vpop.f32.mrb[0].mxu0
      %v1268 = vpop.f32.mrb[0].mxu0
      %v1269 = vadd.f32 %v1093, %v1268
      %v1270 = vpop.f32.mrb[0].mxu0
      %1271 = vdwg.mxu0
      %v1272 = vlaneseq
      %v1273 = vand.u32 %v1272, 127
      %vm1274 = vcmp.lt.s32.totalorder %v1273, 6
      %v1275 = vsel %vm1274, %v1178, -inf
      %v1276 = vsel %vm1274, %v1181, -inf
      %v1277 = vsel %vm1274, %v1186, -inf
      %v1278 = vsel %vm1274, %v1189, -inf
      %v1279 = vsel %vm1274, %v1194, -inf
      %v1280 = vsel %vm1274, %v1197, -inf
      %v1281 = vsel %vm1274, %v1202, -inf
      %v1282 = vsel %vm1274, %v1205, -inf
      %v1283 = vsel %vm1274, %v1210, -inf
      %v1284 = vsel %vm1274, %v1213, -inf
      %v1285 = vsel %vm1274, %v1218, -inf
      %v1286 = vsel %vm1274, %v1221, -inf
      %v1287 = vsel %vm1274, %v1226, -inf
      %v1288 = vsel %vm1274, %v1229, -inf
      %v1289 = vsel %vm1274, %v1234, -inf
      %v1290 = vsel %vm1274, %v1237, -inf
      %v1291 = vsel %vm1274, %v1242, -inf
      %v1292 = vsel %vm1274, %v1245, -inf
      %v1293 = vsel %vm1274, %v1250, -inf
      %v1294 = vsel %vm1274, %v1253, -inf
      %v1295 = vsel %vm1274, %v1258, -inf
      %v1296 = vsel %vm1274, %v1261, -inf
      %v1297 = vsel %vm1274, %v1266, -inf
      %v1298 = vsel %vm1274, %v1269, -inf
      %vm1299 = vcmp.eq.s32.totalorder %v1273, 6
      %v1300 = vsel %vm1299, %v1178, 0.0
      %v1301 = vsel %vm1299, %v1181, 0.0
      %v1302 = vsel %vm1299, %v1186, 0.0
      %v1303 = vsel %vm1299, %v1189, 0.0
      %v1304 = vsel %vm1299, %v1194, 0.0
      %v1305 = vsel %vm1299, %v1197, 0.0
      %v1306 = vsel %vm1299, %v1202, 0.0
      %v1307 = vsel %vm1299, %v1205, 0.0
      %v1308 = vsel %vm1299, %v1210, 0.0
      %v1309 = vsel %vm1299, %v1213, 0.0
      %v1310 = vsel %vm1299, %v1218, 0.0
      %v1311 = vsel %vm1299, %v1221, 0.0
      %v1312 = vsel %vm1299, %v1226, 0.0
      %v1313 = vsel %vm1299, %v1229, 0.0
      %v1314 = vsel %vm1299, %v1234, 0.0
      %v1315 = vsel %vm1299, %v1237, 0.0
      %v1316 = vsel %vm1299, %v1242, 0.0
      %v1317 = vsel %vm1299, %v1245, 0.0
      %v1318 = vsel %vm1299, %v1250, 0.0
      %v1319 = vsel %vm1299, %v1253, 0.0
      %v1320 = vsel %vm1299, %v1258, 0.0
      %v1321 = vsel %vm1299, %v1261, 0.0
      %v1322 = vsel %vm1299, %v1266, 0.0
      %v1323 = vsel %vm1299, %v1269, 0.0
      %1324 = vadd.xlane.f32.xlu0 %v1300
      %v1325 = vpop.xlane.xlu0 %1324
      %1326 = vadd.xlane.f32.xlu0 %v1301
      %v1327 = vpop.xlane.xlu0 %1326
      %1328 = vadd.xlane.f32.xlu0 %v1302
      %v1329 = vpop.xlane.xlu0 %1328
      %1330 = vadd.xlane.f32.xlu0 %v1303
      %v1331 = vpop.xlane.xlu0 %1330
      %1332 = vadd.xlane.f32.xlu0 %v1304
      %v1333 = vpop.xlane.xlu0 %1332
      %1334 = vadd.xlane.f32.xlu0 %v1305
      %v1335 = vpop.xlane.xlu0 %1334
      %1336 = vadd.xlane.f32.xlu0 %v1306
      %v1337 = vpop.xlane.xlu0 %1336
      %1338 = vadd.xlane.f32.xlu0 %v1307
      %v1339 = vpop.xlane.xlu0 %1338
      %1340 = vadd.xlane.f32.xlu0 %v1308
      %v1341 = vpop.xlane.xlu0 %1340
      %1342 = vadd.xlane.f32.xlu0 %v1309
      %v1343 = vpop.xlane.xlu0 %1342
      %1344 = vadd.xlane.f32.xlu0 %v1310
      %v1345 = vpop.xlane.xlu0 %1344
      %1346 = vadd.xlane.f32.xlu0 %v1311
      %v1347 = vpop.xlane.xlu0 %1346
      %1348 = vadd.xlane.f32.xlu0 %v1312
      %v1349 = vpop.xlane.xlu0 %1348
      %1350 = vadd.xlane.f32.xlu0 %v1313
      %v1351 = vpop.xlane.xlu0 %1350
      %1352 = vadd.xlane.f32.xlu0 %v1314
      %v1353 = vpop.xlane.xlu0 %1352
      %1354 = vadd.xlane.f32.xlu0 %v1315
      %v1355 = vpop.xlane.xlu0 %1354
      %1356 = vadd.xlane.f32.xlu0 %v1316
      %v1357 = vpop.xlane.xlu0 %1356
      %1358 = vadd.xlane.f32.xlu0 %v1317
      %v1359 = vpop.xlane.xlu0 %1358
      %1360 = vadd.xlane.f32.xlu0 %v1318
      %v1361 = vpop.xlane.xlu0 %1360
      %1362 = vadd.xlane.f32.xlu0 %v1319
      %v1363 = vpop.xlane.xlu0 %1362
      %1364 = vadd.xlane.f32.xlu0 %v1320
      %v1365 = vpop.xlane.xlu0 %1364
      %1366 = vadd.xlane.f32.xlu0 %v1321
      %v1367 = vpop.xlane.xlu0 %1366
      %1368 = vadd.xlane.f32.xlu0 %v1322
      %v1369 = vpop.xlane.xlu0 %1368
      %1370 = vadd.xlane.f32.xlu0 %v1323
      %v1371 = vpop.xlane.xlu0 %1370
      %1372 = vmax.xlane.f32.xlu0 %v1275
      %v1373 = vpop.xlane.xlu0 %1372
      %1374 = vmax.xlane.f32.xlu0 %v1276
      %v1375 = vpop.xlane.xlu0 %1374
      %1376 = vmax.xlane.f32.xlu0 %v1277
      %v1377 = vpop.xlane.xlu0 %1376
      %1378 = vmax.xlane.f32.xlu0 %v1278
      %v1379 = vpop.xlane.xlu0 %1378
      %1380 = vmax.xlane.f32.xlu0 %v1279
      %v1381 = vpop.xlane.xlu0 %1380
      %1382 = vmax.xlane.f32.xlu0 %v1280
      %v1383 = vpop.xlane.xlu0 %1382
      %1384 = vmax.xlane.f32.xlu0 %v1281
      %v1385 = vpop.xlane.xlu0 %1384
      %1386 = vmax.xlane.f32.xlu0 %v1282
      %v1387 = vpop.xlane.xlu0 %1386
      %1388 = vmax.xlane.f32.xlu0 %v1283
      %v1389 = vpop.xlane.xlu0 %1388
      %1390 = vmax.xlane.f32.xlu0 %v1284
      %v1391 = vpop.xlane.xlu0 %1390
      %1392 = vmax.xlane.f32.xlu0 %v1285
      %v1393 = vpop.xlane.xlu0 %1392
      %1394 = vmax.xlane.f32.xlu0 %v1286
      %v1395 = vpop.xlane.xlu0 %1394
      %1396 = vmax.xlane.f32.xlu0 %v1287
      %v1397 = vpop.xlane.xlu0 %1396
      %1398 = vmax.xlane.f32.xlu0 %v1288
      %v1399 = vpop.xlane.xlu0 %1398
      %1400 = vmax.xlane.f32.xlu0 %v1289
      %v1401 = vpop.xlane.xlu0 %1400
      %1402 = vmax.xlane.f32.xlu0 %v1290
      %v1403 = vpop.xlane.xlu0 %1402
      %1404 = vmax.xlane.f32.xlu0 %v1291
      %v1405 = vpop.xlane.xlu0 %1404
      %1406 = vmax.xlane.f32.xlu0 %v1292
      %v1407 = vpop.xlane.xlu0 %1406
      %1408 = vmax.xlane.f32.xlu0 %v1293
      %v1409 = vpop.xlane.xlu0 %1408
      %1410 = vmax.xlane.f32.xlu0 %v1294
      %v1411 = vpop.xlane.xlu0 %1410
      %1412 = vmax.xlane.f32.xlu0 %v1295
      %v1413 = vpop.xlane.xlu0 %1412
      %1414 = vmax.xlane.f32.xlu0 %v1296
      %v1415 = vpop.xlane.xlu0 %1414
      %1416 = vmax.xlane.f32.xlu0 %v1297
      %v1417 = vpop.xlane.xlu0 %1416
      %1418 = vmax.xlane.f32.xlu0 %v1298
      %v1419 = vpop.xlane.xlu0 %1418
      %v1420 = vsub.f32 %v1275, %v1373
      %v1421 = vsub.f32 %v1276, %v1375
      %v1422 = vsub.f32 %v1277, %v1377
      %v1423 = vsub.f32 %v1278, %v1379
      %v1424 = vsub.f32 %v1279, %v1381
      %v1425 = vsub.f32 %v1280, %v1383
      %v1426 = vsub.f32 %v1281, %v1385
      %v1427 = vsub.f32 %v1282, %v1387
      %v1428 = vsub.f32 %v1283, %v1389
      %v1429 = vsub.f32 %v1284, %v1391
      %v1430 = vsub.f32 %v1285, %v1393
      %v1431 = vsub.f32 %v1286, %v1395
      %v1432 = vsub.f32 %v1287, %v1397
      %v1433 = vsub.f32 %v1288, %v1399
      %v1434 = vsub.f32 %v1289, %v1401
      %v1435 = vsub.f32 %v1290, %v1403
      %v1436 = vsub.f32 %v1291, %v1405
      %v1437 = vsub.f32 %v1292, %v1407
      %v1438 = vsub.f32 %v1293, %v1409
      %v1439 = vsub.f32 %v1294, %v1411
      %v1440 = vsub.f32 %v1295, %v1413
      %v1441 = vsub.f32 %v1296, %v1415
      %v1442 = vsub.f32 %v1297, %v1417
      %v1443 = vsub.f32 %v1298, %v1419
      %v1444 = vmul.f32 %v1420, 1.442695
      %v1445 = vpow.pop %v1444
      %v1446 = vmul.f32 %v1421, 1.442695
      %v1447 = vpow.pop %v1446
      %v1448 = vmul.f32 %v1422, 1.442695
      %v1449 = vpow.pop %v1448
      %v1450 = vmul.f32 %v1423, 1.442695
      %v1451 = vpow.pop %v1450
      %v1452 = vmul.f32 %v1424, 1.442695
      %v1453 = vpow.pop %v1452
      %v1454 = vmul.f32 %v1425, 1.442695
      %v1455 = vpow.pop %v1454
      %v1456 = vmul.f32 %v1426, 1.442695
      %v1457 = vpow.pop %v1456
      %v1458 = vmul.f32 %v1427, 1.442695
      %v1459 = vpow.pop %v1458
      %v1460 = vmul.f32 %v1428, 1.442695
      %v1461 = vpow.pop %v1460
      %v1462 = vmul.f32 %v1429, 1.442695
      %v1463 = vpow.pop %v1462
      %v1464 = vmul.f32 %v1430, 1.442695
      %v1465 = vpow.pop %v1464
      %v1466 = vmul.f32 %v1431, 1.442695
      %v1467 = vpow.pop %v1466
      %v1468 = vmul.f32 %v1432, 1.442695
      %v1469 = vpow.pop %v1468
      %v1470 = vmul.f32 %v1433, 1.442695
      %v1471 = vpow.pop %v1470
      %v1472 = vmul.f32 %v1434, 1.442695
      %v1473 = vpow.pop %v1472
      %v1474 = vmul.f32 %v1435, 1.442695
      %v1475 = vpow.pop %v1474
      %v1476 = vmul.f32 %v1436, 1.442695
      %v1477 = vpow.pop %v1476
      %v1478 = vmul.f32 %v1437, 1.442695
      %v1479 = vpow.pop %v1478
      %v1480 = vmul.f32 %v1438, 1.442695
      %v1481 = vpow.pop %v1480
      %v1482 = vmul.f32 %v1439, 1.442695
      %v1483 = vpow.pop %v1482
      %v1484 = vmul.f32 %v1440, 1.442695
      %v1485 = vpow.pop %v1484
      %v1486 = vmul.f32 %v1441, 1.442695
      %v1487 = vpow.pop %v1486
      %v1488 = vmul.f32 %v1442, 1.442695
      %v1489 = vpow.pop %v1488
      %v1490 = vmul.f32 %v1443, 1.442695
      %v1491 = vpow.pop %v1490
      %1492 = vadd.xlane.f32.xlu0 %v1445
      %v1493 = vpop.xlane.xlu0 %1492
      %1494 = vadd.xlane.f32.xlu0 %v1447
      %v1495 = vpop.xlane.xlu0 %1494
      %1496 = vadd.xlane.f32.xlu0 %v1449
      %v1497 = vpop.xlane.xlu0 %1496
      %1498 = vadd.xlane.f32.xlu0 %v1451
      %v1499 = vpop.xlane.xlu0 %1498
      %1500 = vadd.xlane.f32.xlu0 %v1453
      %v1501 = vpop.xlane.xlu0 %1500
      %1502 = vadd.xlane.f32.xlu0 %v1455
      %v1503 = vpop.xlane.xlu0 %1502
      %1504 = vadd.xlane.f32.xlu0 %v1457
      %v1505 = vpop.xlane.xlu0 %1504
      %1506 = vadd.xlane.f32.xlu0 %v1459
      %v1507 = vpop.xlane.xlu0 %1506
      %1508 = vadd.xlane.f32.xlu0 %v1461
      %v1509 = vpop.xlane.xlu0 %1508
      %1510 = vadd.xlane.f32.xlu0 %v1463
      %v1511 = vpop.xlane.xlu0 %1510
      %1512 = vadd.xlane.f32.xlu0 %v1465
      %v1513 = vpop.xlane.xlu0 %1512
      %1514 = vadd.xlane.f32.xlu0 %v1467
      %v1515 = vpop.xlane.xlu0 %1514
      %1516 = vadd.xlane.f32.xlu0 %v1469
      %v1517 = vpop.xlane.xlu0 %1516
      %1518 = vadd.xlane.f32.xlu0 %v1471
      %v1519 = vpop.xlane.xlu0 %1518
      %1520 = vadd.xlane.f32.xlu0 %v1473
      %v1521 = vpop.xlane.xlu0 %1520
      %1522 = vadd.xlane.f32.xlu0 %v1475
      %v1523 = vpop.xlane.xlu0 %1522
      %1524 = vadd.xlane.f32.xlu0 %v1477
      %v1525 = vpop.xlane.xlu0 %1524
      %1526 = vadd.xlane.f32.xlu0 %v1479
      %v1527 = vpop.xlane.xlu0 %1526
      %1528 = vadd.xlane.f32.xlu0 %v1481
      %v1529 = vpop.xlane.xlu0 %1528
      %1530 = vadd.xlane.f32.xlu0 %v1483
      %v1531 = vpop.xlane.xlu0 %1530
      %1532 = vadd.xlane.f32.xlu0 %v1485
      %v1533 = vpop.xlane.xlu0 %1532
      %1534 = vadd.xlane.f32.xlu0 %v1487
      %v1535 = vpop.xlane.xlu0 %1534
      %1536 = vadd.xlane.f32.xlu0 %v1489
      %v1537 = vpop.xlane.xlu0 %1536
      %1538 = vadd.xlane.f32.xlu0 %v1491
      %v1539 = vpop.xlane.xlu0 %1538
      %v1540 = vlog2.pop %v1493
      %v1541 = vmul.f32 %v1540, 0.6931472
      %v1542 = vlog2.pop %v1495
      %v1543 = vmul.f32 %v1542, 0.6931472
      %v1544 = vlog2.pop %v1497
      %v1545 = vmul.f32 %v1544, 0.6931472
      %v1546 = vlog2.pop %v1499
      %v1547 = vmul.f32 %v1546, 0.6931472
      %v1548 = vlog2.pop %v1501
      %v1549 = vmul.f32 %v1548, 0.6931472
      %v1550 = vlog2.pop %v1503
      %v1551 = vmul.f32 %v1550, 0.6931472
      %v1552 = vlog2.pop %v1505
      %v1553 = vmul.f32 %v1552, 0.6931472
      %v1554 = vlog2.pop %v1507
      %v1555 = vmul.f32 %v1554, 0.6931472
      %v1556 = vlog2.pop %v1509
      %v1557 = vmul.f32 %v1556, 0.6931472
      %v1558 = vlog2.pop %v1511
      %v1559 = vmul.f32 %v1558, 0.6931472
      %v1560 = vlog2.pop %v1513
      %v1561 = vmul.f32 %v1560, 0.6931472
      %v1562 = vlog2.pop %v1515
      %v1563 = vmul.f32 %v1562, 0.6931472
      %v1564 = vlog2.pop %v1517
      %v1565 = vmul.f32 %v1564, 0.6931472
      %v1566 = vlog2.pop %v1519
      %v1567 = vmul.f32 %v1566, 0.6931472
      %v1568 = vlog2.pop %v1521
      %v1569 = vmul.f32 %v1568, 0.6931472
      %v1570 = vlog2.pop %v1523
      %v1571 = vmul.f32 %v1570, 0.6931472
      %v1572 = vlog2.pop %v1525
      %v1573 = vmul.f32 %v1572, 0.6931472
      %v1574 = vlog2.pop %v1527
      %v1575 = vmul.f32 %v1574, 0.6931472
      %v1576 = vlog2.pop %v1529
      %v1577 = vmul.f32 %v1576, 0.6931472
      %v1578 = vlog2.pop %v1531
      %v1579 = vmul.f32 %v1578, 0.6931472
      %v1580 = vlog2.pop %v1533
      %v1581 = vmul.f32 %v1580, 0.6931472
      %v1582 = vlog2.pop %v1535
      %v1583 = vmul.f32 %v1582, 0.6931472
      %v1584 = vlog2.pop %v1537
      %v1585 = vmul.f32 %v1584, 0.6931472
      %v1586 = vlog2.pop %v1539
      %v1587 = vmul.f32 %v1586, 0.6931472
      %v1588 = vlaneseq
      %v1589 = vshrl.u32 %v1588, 7
      %v1590 = vadd.s32 %v1589, 8
      %v1591 = vadd.s32 %v1589, 16
      %v1592 = vadd.s32 %v1589, 24
      %v1593 = vadd.s32 %v1589, 32
      %v1594 = vadd.s32 %v1589, 40
      %v1595 = vadd.s32 %v1589, 48
      %v1596 = vadd.s32 %v1589, 56
      %v1597 = vadd.s32 %v1589, 64
      %v1598 = vadd.s32 %v1589, 72
      %v1599 = vadd.s32 %v1589, 80
      %v1600 = vadd.s32 %v1589, 88
      %v1601 = vadd.s32 %v1589, 96
      %v1602 = vadd.s32 %v1589, 104
      %v1603 = vadd.s32 %v1589, 112
      %v1604 = vadd.s32 %v1589, 120
      %v1605 = vadd.s32 %v1589, 128
      %v1606 = vadd.s32 %v1589, 136
      %v1607 = vadd.s32 %v1589, 144
      %v1608 = vadd.s32 %v1589, 152
      %v1609 = vadd.s32 %v1589, 160
      %v1610 = vadd.s32 %v1589, 168
      %v1611 = vadd.s32 %v1589, 176
      %v1612 = vadd.s32 %v1589, 184
      %s1613 = smul.u32 %s22, 192
      %v1614 = vstv %s1613
      %v1615 = vadd.s32 %v1589, %v1614
      %v1616 = vadd.s32 %v1590, %v1614
      %v1617 = vadd.s32 %v1591, %v1614
      %v1618 = vadd.s32 %v1592, %v1614
      %v1619 = vadd.s32 %v1593, %v1614
      %v1620 = vadd.s32 %v1594, %v1614
      %v1621 = vadd.s32 %v1595, %v1614
      %v1622 = vadd.s32 %v1596, %v1614
      %v1623 = vadd.s32 %v1597, %v1614
      %v1624 = vadd.s32 %v1598, %v1614
      %v1625 = vadd.s32 %v1599, %v1614
      %v1626 = vadd.s32 %v1600, %v1614
      %v1627 = vadd.s32 %v1601, %v1614
      %v1628 = vadd.s32 %v1602, %v1614
      %v1629 = vadd.s32 %v1603, %v1614
      %v1630 = vadd.s32 %v1604, %v1614
      %v1631 = vadd.s32 %v1605, %v1614
      %v1632 = vadd.s32 %v1606, %v1614
      %v1633 = vadd.s32 %v1607, %v1614
      %v1634 = vadd.s32 %v1608, %v1614
      %v1635 = vadd.s32 %v1609, %v1614
      %v1636 = vadd.s32 %v1610, %v1614
      %v1637 = vadd.s32 %v1611, %v1614
      %v1638 = vadd.s32 %v1612, %v1614
      %v1639 = vmul.u32 %v1615, 128
      %v1640 = vmul.u32 %v1616, 128
      %v1641 = vmul.u32 %v1617, 128
      %v1642 = vmul.u32 %v1618, 128
      %v1643 = vmul.u32 %v1619, 128
      %v1644 = vmul.u32 %v1620, 128
      %v1645 = vmul.u32 %v1621, 128
      %v1646 = vmul.u32 %v1622, 128
      %v1647 = vmul.u32 %v1623, 128
      %v1648 = vmul.u32 %v1624, 128
      %v1649 = vmul.u32 %v1625, 128
      %v1650 = vmul.u32 %v1626, 128
      %v1651 = vmul.u32 %v1627, 128
      %v1652 = vmul.u32 %v1628, 128
      %v1653 = vmul.u32 %v1629, 128
      %v1654 = vmul.u32 %v1630, 128
      %v1655 = vmul.u32 %v1631, 128
      %v1656 = vmul.u32 %v1632, 128
      %v1657 = vmul.u32 %v1633, 128
      %v1658 = vmul.u32 %v1634, 128
      %v1659 = vmul.u32 %v1635, 128
      %v1660 = vmul.u32 %v1636, 128
      %v1661 = vmul.u32 %v1637, 128
      %v1662 = vmul.u32 %v1638, 128
      %v1663 = vadd.s32 %v1639, %v1273
      %v1664 = vadd.s32 %v1640, %v1273
      %v1665 = vadd.s32 %v1641, %v1273
      %v1666 = vadd.s32 %v1642, %v1273
      %v1667 = vadd.s32 %v1643, %v1273
      %v1668 = vadd.s32 %v1644, %v1273
      %v1669 = vadd.s32 %v1645, %v1273
      %v1670 = vadd.s32 %v1646, %v1273
      %v1671 = vadd.s32 %v1647, %v1273
      %v1672 = vadd.s32 %v1648, %v1273
      %v1673 = vadd.s32 %v1649, %v1273
      %v1674 = vadd.s32 %v1650, %v1273
      %v1675 = vadd.s32 %v1651, %v1273
      %v1676 = vadd.s32 %v1652, %v1273
      %v1677 = vadd.s32 %v1653, %v1273
      %v1678 = vadd.s32 %v1654, %v1273
      %v1679 = vadd.s32 %v1655, %v1273
      %v1680 = vadd.s32 %v1656, %v1273
      %v1681 = vadd.s32 %v1657, %v1273
      %v1682 = vadd.s32 %v1658, %v1273
      %v1683 = vadd.s32 %v1659, %v1273
      %v1684 = vadd.s32 %v1660, %v1273
      %v1685 = vadd.s32 %v1661, %v1273
      %v1686 = vadd.s32 %v1662, %v1273
      %s1687 = sld [smem:[#allocation3]]
      %s1688 = smul.u32 %s1687, 2654435769
      %v1689 = vstv %s1688
      %v1690 = vxor.u32 %v1663, %v1689
      %v1691 = vxor.u32 %v1664, %v1689
      %v1692 = vxor.u32 %v1665, %v1689
      %v1693 = vxor.u32 %v1666, %v1689
      %v1694 = vxor.u32 %v1667, %v1689
      %v1695 = vxor.u32 %v1668, %v1689
      %v1696 = vxor.u32 %v1669, %v1689
      %v1697 = vxor.u32 %v1670, %v1689
      %v1698 = vxor.u32 %v1671, %v1689
      %v1699 = vxor.u32 %v1672, %v1689
      %v1700 = vxor.u32 %v1673, %v1689
      %v1701 = vxor.u32 %v1674, %v1689
      %v1702 = vxor.u32 %v1675, %v1689
      %v1703 = vxor.u32 %v1676, %v1689
      %v1704 = vxor.u32 %v1677, %v1689
      %v1705 = vxor.u32 %v1678, %v1689
      %v1706 = vxor.u32 %v1679, %v1689
      %v1707 = vxor.u32 %v1680, %v1689
      %v1708 = vxor.u32 %v1681, %v1689
      %v1709 = vxor.u32 %v1682, %v1689
      %v1710 = vxor.u32 %v1683, %v1689
      %v1711 = vxor.u32 %v1684, %v1689
      %v1712 = vxor.u32 %v1685, %v1689
      %v1713 = vxor.u32 %v1686, %v1689
      %v1714 = vshrl.u32 %v1690, 16
      %v1715 = vshrl.u32 %v1691, 16
      %v1716 = vshrl.u32 %v1692, 16
      %v1717 = vshrl.u32 %v1693, 16
      %v1718 = vshrl.u32 %v1694, 16
      %v1719 = vshrl.u32 %v1695, 16
      %v1720 = vshrl.u32 %v1696, 16
      %v1721 = vshrl.u32 %v1697, 16
      %v1722 = vshrl.u32 %v1698, 16
      %v1723 = vshrl.u32 %v1699, 16
      %v1724 = vshrl.u32 %v1700, 16
      %v1725 = vshrl.u32 %v1701, 16
      %v1726 = vshrl.u32 %v1702, 16
      %v1727 = vshrl.u32 %v1703, 16
      %v1728 = vshrl.u32 %v1704, 16
      %v1729 = vshrl.u32 %v1705, 16
      %v1730 = vshrl.u32 %v1706, 16
      %v1731 = vshrl.u32 %v1707, 16
      %v1732 = vshrl.u32 %v1708, 16
      %v1733 = vshrl.u32 %v1709, 16
      %v1734 = vshrl.u32 %v1710, 16
      %v1735 = vshrl.u32 %v1711, 16
      %v1736 = vshrl.u32 %v1712, 16
      %v1737 = vshrl.u32 %v1713, 16
      %v1738 = vxor.u32 %v1690, %v1714
      %v1739 = vxor.u32 %v1691, %v1715
      %v1740 = vxor.u32 %v1692, %v1716
      %v1741 = vxor.u32 %v1693, %v1717
      %v1742 = vxor.u32 %v1694, %v1718
      %v1743 = vxor.u32 %v1695, %v1719
      %v1744 = vxor.u32 %v1696, %v1720
      %v1745 = vxor.u32 %v1697, %v1721
      %v1746 = vxor.u32 %v1698, %v1722
      %v1747 = vxor.u32 %v1699, %v1723
      %v1748 = vxor.u32 %v1700, %v1724
      %v1749 = vxor.u32 %v1701, %v1725
      %v1750 = vxor.u32 %v1702, %v1726
      %v1751 = vxor.u32 %v1703, %v1727
      %v1752 = vxor.u32 %v1704, %v1728
      %v1753 = vxor.u32 %v1705, %v1729
      %v1754 = vxor.u32 %v1706, %v1730
      %v1755 = vxor.u32 %v1707, %v1731
      %v1756 = vxor.u32 %v1708, %v1732
      %v1757 = vxor.u32 %v1709, %v1733
      %v1758 = vxor.u32 %v1710, %v1734
      %v1759 = vxor.u32 %v1711, %v1735
      %v1760 = vxor.u32 %v1712, %v1736
      %v1761 = vxor.u32 %v1713, %v1737
      %v1762 = vmul.u32 %v1738, 2146121005
      %v1763 = vmul.u32 %v1739, 2146121005
      %v1764 = vmul.u32 %v1740, 2146121005
      %v1765 = vmul.u32 %v1741, 2146121005
      %v1766 = vmul.u32 %v1742, 2146121005
      %v1767 = vmul.u32 %v1743, 2146121005
      %v1768 = vmul.u32 %v1744, 2146121005
      %v1769 = vmul.u32 %v1745, 2146121005
      %v1770 = vmul.u32 %v1746, 2146121005
      %v1771 = vmul.u32 %v1747, 2146121005
      %v1772 = vmul.u32 %v1748, 2146121005
      %v1773 = vmul.u32 %v1749, 2146121005
      %v1774 = vmul.u32 %v1750, 2146121005
      %v1775 = vmul.u32 %v1751, 2146121005
      %v1776 = vmul.u32 %v1752, 2146121005
      %v1777 = vmul.u32 %v1753, 2146121005
      %v1778 = vmul.u32 %v1754, 2146121005
      %v1779 = vmul.u32 %v1755, 2146121005
      %v1780 = vmul.u32 %v1756, 2146121005
      %v1781 = vmul.u32 %v1757, 2146121005
      %v1782 = vmul.u32 %v1758, 2146121005
      %v1783 = vmul.u32 %v1759, 2146121005
      %v1784 = vmul.u32 %v1760, 2146121005
      %v1785 = vmul.u32 %v1761, 2146121005
      %v1786 = vshrl.u32 %v1762, 15
      %v1787 = vshrl.u32 %v1763, 15
      %v1788 = vshrl.u32 %v1764, 15
      %v1789 = vshrl.u32 %v1765, 15
      %v1790 = vshrl.u32 %v1766, 15
      %v1791 = vshrl.u32 %v1767, 15
      %v1792 = vshrl.u32 %v1768, 15
      %v1793 = vshrl.u32 %v1769, 15
      %v1794 = vshrl.u32 %v1770, 15
      %v1795 = vshrl.u32 %v1771, 15
      %v1796 = vshrl.u32 %v1772, 15
      %v1797 = vshrl.u32 %v1773, 15
      %v1798 = vshrl.u32 %v1774, 15
      %v1799 = vshrl.u32 %v1775, 15
      %v1800 = vshrl.u32 %v1776, 15
      %v1801 = vshrl.u32 %v1777, 15
      %v1802 = vshrl.u32 %v1778, 15
      %v1803 = vshrl.u32 %v1779, 15
      %v1804 = vshrl.u32 %v1780, 15
      %v1805 = vshrl.u32 %v1781, 15
      %v1806 = vshrl.u32 %v1782, 15
      %v1807 = vshrl.u32 %v1783, 15
      %v1808 = vshrl.u32 %v1784, 15
      %v1809 = vshrl.u32 %v1785, 15
      %v1810 = vxor.u32 %v1762, %v1786
      %v1811 = vxor.u32 %v1763, %v1787
      %v1812 = vxor.u32 %v1764, %v1788
      %v1813 = vxor.u32 %v1765, %v1789
      %v1814 = vxor.u32 %v1766, %v1790
      %v1815 = vxor.u32 %v1767, %v1791
      %v1816 = vxor.u32 %v1768, %v1792
      %v1817 = vxor.u32 %v1769, %v1793
      %v1818 = vxor.u32 %v1770, %v1794
      %v1819 = vxor.u32 %v1771, %v1795
      %v1820 = vxor.u32 %v1772, %v1796
      %v1821 = vxor.u32 %v1773, %v1797
      %v1822 = vxor.u32 %v1774, %v1798
      %v1823 = vxor.u32 %v1775, %v1799
      %v1824 = vxor.u32 %v1776, %v1800
      %v1825 = vxor.u32 %v1777, %v1801
      %v1826 = vxor.u32 %v1778, %v1802
      %v1827 = vxor.u32 %v1779, %v1803
      %v1828 = vxor.u32 %v1780, %v1804
      %v1829 = vxor.u32 %v1781, %v1805
      %v1830 = vxor.u32 %v1782, %v1806
      %v1831 = vxor.u32 %v1783, %v1807
      %v1832 = vxor.u32 %v1784, %v1808
      %v1833 = vxor.u32 %v1785, %v1809
      %v1834 = vmul.u32 %v1810, 2221713035
      %v1835 = vmul.u32 %v1811, 2221713035
      %v1836 = vmul.u32 %v1812, 2221713035
      %v1837 = vmul.u32 %v1813, 2221713035
      %v1838 = vmul.u32 %v1814, 2221713035
      %v1839 = vmul.u32 %v1815, 2221713035
      %v1840 = vmul.u32 %v1816, 2221713035
      %v1841 = vmul.u32 %v1817, 2221713035
      %v1842 = vmul.u32 %v1818, 2221713035
      %v1843 = vmul.u32 %v1819, 2221713035
      %v1844 = vmul.u32 %v1820, 2221713035
      %v1845 = vmul.u32 %v1821, 2221713035
      %v1846 = vmul.u32 %v1822, 2221713035
      %v1847 = vmul.u32 %v1823, 2221713035
      %v1848 = vmul.u32 %v1824, 2221713035
      %v1849 = vmul.u32 %v1825, 2221713035
      %v1850 = vmul.u32 %v1826, 2221713035
      %v1851 = vmul.u32 %v1827, 2221713035
      %v1852 = vmul.u32 %v1828, 2221713035
      %v1853 = vmul.u32 %v1829, 2221713035
      %v1854 = vmul.u32 %v1830, 2221713035
      %v1855 = vmul.u32 %v1831, 2221713035
      %v1856 = vmul.u32 %v1832, 2221713035
      %v1857 = vmul.u32 %v1833, 2221713035
      %v1858 = vshrl.u32 %v1834, 16
      %v1859 = vshrl.u32 %v1835, 16
      %v1860 = vshrl.u32 %v1836, 16
      %v1861 = vshrl.u32 %v1837, 16
      %v1862 = vshrl.u32 %v1838, 16
      %v1863 = vshrl.u32 %v1839, 16
      %v1864 = vshrl.u32 %v1840, 16
      %v1865 = vshrl.u32 %v1841, 16
      %v1866 = vshrl.u32 %v1842, 16
      %v1867 = vshrl.u32 %v1843, 16
      %v1868 = vshrl.u32 %v1844, 16
      %v1869 = vshrl.u32 %v1845, 16
      %v1870 = vshrl.u32 %v1846, 16
      %v1871 = vshrl.u32 %v1847, 16
      %v1872 = vshrl.u32 %v1848, 16
      %v1873 = vshrl.u32 %v1849, 16
      %v1874 = vshrl.u32 %v1850, 16
      %v1875 = vshrl.u32 %v1851, 16
      %v1876 = vshrl.u32 %v1852, 16
      %v1877 = vshrl.u32 %v1853, 16
      %v1878 = vshrl.u32 %v1854, 16
      %v1879 = vshrl.u32 %v1855, 16
      %v1880 = vshrl.u32 %v1856, 16
      %v1881 = vshrl.u32 %v1857, 16
      %v1882 = vxor.u32 %v1834, %v1858
      %v1883 = vxor.u32 %v1835, %v1859
      %v1884 = vxor.u32 %v1836, %v1860
      %v1885 = vxor.u32 %v1837, %v1861
      %v1886 = vxor.u32 %v1838, %v1862
      %v1887 = vxor.u32 %v1839, %v1863
      %v1888 = vxor.u32 %v1840, %v1864
      %v1889 = vxor.u32 %v1841, %v1865
      %v1890 = vxor.u32 %v1842, %v1866
      %v1891 = vxor.u32 %v1843, %v1867
      %v1892 = vxor.u32 %v1844, %v1868
      %v1893 = vxor.u32 %v1845, %v1869
      %v1894 = vxor.u32 %v1846, %v1870
      %v1895 = vxor.u32 %v1847, %v1871
      %v1896 = vxor.u32 %v1848, %v1872
      %v1897 = vxor.u32 %v1849, %v1873
      %v1898 = vxor.u32 %v1850, %v1874
      %v1899 = vxor.u32 %v1851, %v1875
      %v1900 = vxor.u32 %v1852, %v1876
      %v1901 = vxor.u32 %v1853, %v1877
      %v1902 = vxor.u32 %v1854, %v1878
      %v1903 = vxor.u32 %v1855, %v1879
      %v1904 = vxor.u32 %v1856, %v1880
      %v1905 = vxor.u32 %v1857, %v1881
      %v1906 = vshrl.u32 %v1882, 9
      %v1907 = vshrl.u32 %v1883, 9
      %v1908 = vshrl.u32 %v1884, 9
      %v1909 = vshrl.u32 %v1885, 9
      %v1910 = vshrl.u32 %v1886, 9
      %v1911 = vshrl.u32 %v1887, 9
      %v1912 = vshrl.u32 %v1888, 9
      %v1913 = vshrl.u32 %v1889, 9
      %v1914 = vshrl.u32 %v1890, 9
      %v1915 = vshrl.u32 %v1891, 9
      %v1916 = vshrl.u32 %v1892, 9
      %v1917 = vshrl.u32 %v1893, 9
      %v1918 = vshrl.u32 %v1894, 9
      %v1919 = vshrl.u32 %v1895, 9
      %v1920 = vshrl.u32 %v1896, 9
      %v1921 = vshrl.u32 %v1897, 9
      %v1922 = vshrl.u32 %v1898, 9
      %v1923 = vshrl.u32 %v1899, 9
      %v1924 = vshrl.u32 %v1900, 9
      %v1925 = vshrl.u32 %v1901, 9
      %v1926 = vshrl.u32 %v1902, 9
      %v1927 = vshrl.u32 %v1903, 9
      %v1928 = vshrl.u32 %v1904, 9
      %v1929 = vshrl.u32 %v1905, 9
      %v1930 = vcvt.s32.f32 %v1906
      %v1931 = vcvt.s32.f32 %v1907
      %v1932 = vcvt.s32.f32 %v1908
      %v1933 = vcvt.s32.f32 %v1909
      %v1934 = vcvt.s32.f32 %v1910
      %v1935 = vcvt.s32.f32 %v1911
      %v1936 = vcvt.s32.f32 %v1912
      %v1937 = vcvt.s32.f32 %v1913
      %v1938 = vcvt.s32.f32 %v1914
      %v1939 = vcvt.s32.f32 %v1915
      %v1940 = vcvt.s32.f32 %v1916
      %v1941 = vcvt.s32.f32 %v1917
      %v1942 = vcvt.s32.f32 %v1918
      %v1943 = vcvt.s32.f32 %v1919
      %v1944 = vcvt.s32.f32 %v1920
      %v1945 = vcvt.s32.f32 %v1921
      %v1946 = vcvt.s32.f32 %v1922
      %v1947 = vcvt.s32.f32 %v1923
      %v1948 = vcvt.s32.f32 %v1924
      %v1949 = vcvt.s32.f32 %v1925
      %v1950 = vcvt.s32.f32 %v1926
      %v1951 = vcvt.s32.f32 %v1927
      %v1952 = vcvt.s32.f32 %v1928
      %v1953 = vcvt.s32.f32 %v1929
      %v1954 = vmul.f32 %v1930, 1.1920929e-07
      %v1955 = vmul.f32 %v1931, 1.1920929e-07
      %v1956 = vmul.f32 %v1932, 1.1920929e-07
      %v1957 = vmul.f32 %v1933, 1.1920929e-07
      %v1958 = vmul.f32 %v1934, 1.1920929e-07
      %v1959 = vmul.f32 %v1935, 1.1920929e-07
      %v1960 = vmul.f32 %v1936, 1.1920929e-07
      %v1961 = vmul.f32 %v1937, 1.1920929e-07
      %v1962 = vmul.f32 %v1938, 1.1920929e-07
      %v1963 = vmul.f32 %v1939, 1.1920929e-07
      %v1964 = vmul.f32 %v1940, 1.1920929e-07
      %v1965 = vmul.f32 %v1941, 1.1920929e-07
      %v1966 = vmul.f32 %v1942, 1.1920929e-07
      %v1967 = vmul.f32 %v1943, 1.1920929e-07
      %v1968 = vmul.f32 %v1944, 1.1920929e-07
      %v1969 = vmul.f32 %v1945, 1.1920929e-07
      %v1970 = vmul.f32 %v1946, 1.1920929e-07
      %v1971 = vmul.f32 %v1947, 1.1920929e-07
      %v1972 = vmul.f32 %v1948, 1.1920929e-07
      %v1973 = vmul.f32 %v1949, 1.1920929e-07
      %v1974 = vmul.f32 %v1950, 1.1920929e-07
      %v1975 = vmul.f32 %v1951, 1.1920929e-07
      %v1976 = vmul.f32 %v1952, 1.1920929e-07
      %v1977 = vmul.f32 %v1953, 1.1920929e-07
      %v1978 = vmax.f32 %v1954, 1e-07
      %v1979 = vmax.f32 %v1955, 1e-07
      %v1980 = vmax.f32 %v1956, 1e-07
      %v1981 = vmax.f32 %v1957, 1e-07
      %v1982 = vmax.f32 %v1958, 1e-07
      %v1983 = vmax.f32 %v1959, 1e-07
      %v1984 = vmax.f32 %v1960, 1e-07
      %v1985 = vmax.f32 %v1961, 1e-07
      %v1986 = vmax.f32 %v1962, 1e-07
      %v1987 = vmax.f32 %v1963, 1e-07
      %v1988 = vmax.f32 %v1964, 1e-07
      %v1989 = vmax.f32 %v1965, 1e-07
      %v1990 = vmax.f32 %v1966, 1e-07
      %v1991 = vmax.f32 %v1967, 1e-07
      %v1992 = vmax.f32 %v1968, 1e-07
      %v1993 = vmax.f32 %v1969, 1e-07
      %v1994 = vmax.f32 %v1970, 1e-07
      %v1995 = vmax.f32 %v1971, 1e-07
      %v1996 = vmax.f32 %v1972, 1e-07
      %v1997 = vmax.f32 %v1973, 1e-07
      %v1998 = vmax.f32 %v1974, 1e-07
      %v1999 = vmax.f32 %v1975, 1e-07
      %v2000 = vmax.f32 %v1976, 1e-07
      %v2001 = vmax.f32 %v1977, 1e-07
      %v2002 = vlog2.pop %v1978
      %v2003 = vmul.f32 %v2002, 0.6931472
      %v2004 = vlog2.pop %v1979
      %v2005 = vmul.f32 %v2004, 0.6931472
      %v2006 = vlog2.pop %v1980
      %v2007 = vmul.f32 %v2006, 0.6931472
      %v2008 = vlog2.pop %v1981
      %v2009 = vmul.f32 %v2008, 0.6931472
      %v2010 = vlog2.pop %v1982
      %v2011 = vmul.f32 %v2010, 0.6931472
      %v2012 = vlog2.pop %v1983
      %v2013 = vmul.f32 %v2012, 0.6931472
      %v2014 = vlog2.pop %v1984
      %v2015 = vmul.f32 %v2014, 0.6931472
      %v2016 = vlog2.pop %v1985
      %v2017 = vmul.f32 %v2016, 0.6931472
      %v2018 = vlog2.pop %v1986
      %v2019 = vmul.f32 %v2018, 0.6931472
      %v2020 = vlog2.pop %v1987
      %v2021 = vmul.f32 %v2020, 0.6931472
      %v2022 = vlog2.pop %v1988
      %v2023 = vmul.f32 %v2022, 0.6931472
      %v2024 = vlog2.pop %v1989
      %v2025 = vmul.f32 %v2024, 0.6931472
      %v2026 = vlog2.pop %v1990
      %v2027 = vmul.f32 %v2026, 0.6931472
      %v2028 = vlog2.pop %v1991
      %v2029 = vmul.f32 %v2028, 0.6931472
      %v2030 = vlog2.pop %v1992
      %v2031 = vmul.f32 %v2030, 0.6931472
      %v2032 = vlog2.pop %v1993
      %v2033 = vmul.f32 %v2032, 0.6931472
      %v2034 = vlog2.pop %v1994
      %v2035 = vmul.f32 %v2034, 0.6931472
      %v2036 = vlog2.pop %v1995
      %v2037 = vmul.f32 %v2036, 0.6931472
      %v2038 = vlog2.pop %v1996
      %v2039 = vmul.f32 %v2038, 0.6931472
      %v2040 = vlog2.pop %v1997
      %v2041 = vmul.f32 %v2040, 0.6931472
      %v2042 = vlog2.pop %v1998
      %v2043 = vmul.f32 %v2042, 0.6931472
      %v2044 = vlog2.pop %v1999
      %v2045 = vmul.f32 %v2044, 0.6931472
      %v2046 = vlog2.pop %v2000
      %v2047 = vmul.f32 %v2046, 0.6931472
      %v2048 = vlog2.pop %v2001
      %v2049 = vmul.f32 %v2048, 0.6931472
      %v2050 = vsub.f32 0.0, %v2003
      %v2051 = vsub.f32 0.0, %v2005
      %v2052 = vsub.f32 0.0, %v2007
      %v2053 = vsub.f32 0.0, %v2009
      %v2054 = vsub.f32 0.0, %v2011
      %v2055 = vsub.f32 0.0, %v2013
      %v2056 = vsub.f32 0.0, %v2015
      %v2057 = vsub.f32 0.0, %v2017
      %v2058 = vsub.f32 0.0, %v2019
      %v2059 = vsub.f32 0.0, %v2021
      %v2060 = vsub.f32 0.0, %v2023
      %v2061 = vsub.f32 0.0, %v2025
      %v2062 = vsub.f32 0.0, %v2027
      %v2063 = vsub.f32 0.0, %v2029
      %v2064 = vsub.f32 0.0, %v2031
      %v2065 = vsub.f32 0.0, %v2033
      %v2066 = vsub.f32 0.0, %v2035
      %v2067 = vsub.f32 0.0, %v2037
      %v2068 = vsub.f32 0.0, %v2039
      %v2069 = vsub.f32 0.0, %v2041
      %v2070 = vsub.f32 0.0, %v2043
      %v2071 = vsub.f32 0.0, %v2045
      %v2072 = vsub.f32 0.0, %v2047
      %v2073 = vsub.f32 0.0, %v2049
      %v2074 = vlog2.pop %v2050
      %v2075 = vmul.f32 %v2074, 0.6931472
      %v2076 = vlog2.pop %v2051
      %v2077 = vmul.f32 %v2076, 0.6931472
      %v2078 = vlog2.pop %v2052
      %v2079 = vmul.f32 %v2078, 0.6931472
      %v2080 = vlog2.pop %v2053
      %v2081 = vmul.f32 %v2080, 0.6931472
      %v2082 = vlog2.pop %v2054
      %v2083 = vmul.f32 %v2082, 0.6931472
      %v2084 = vlog2.pop %v2055
      %v2085 = vmul.f32 %v2084, 0.6931472
      %v2086 = vlog2.pop %v2056
      %v2087 = vmul.f32 %v2086, 0.6931472
      %v2088 = vlog2.pop %v2057
      %v2089 = vmul.f32 %v2088, 0.6931472
      %v2090 = vlog2.pop %v2058
      %v2091 = vmul.f32 %v2090, 0.6931472
      %v2092 = vlog2.pop %v2059
      %v2093 = vmul.f32 %v2092, 0.6931472
      %v2094 = vlog2.pop %v2060
      %v2095 = vmul.f32 %v2094, 0.6931472
      %v2096 = vlog2.pop %v2061
      %v2097 = vmul.f32 %v2096, 0.6931472
      %v2098 = vlog2.pop %v2062
      %v2099 = vmul.f32 %v2098, 0.6931472
      %v2100 = vlog2.pop %v2063
      %v2101 = vmul.f32 %v2100, 0.6931472
      %v2102 = vlog2.pop %v2064
      %v2103 = vmul.f32 %v2102, 0.6931472
      %v2104 = vlog2.pop %v2065
      %v2105 = vmul.f32 %v2104, 0.6931472
      %v2106 = vlog2.pop %v2066
      %v2107 = vmul.f32 %v2106, 0.6931472
      %v2108 = vlog2.pop %v2067
      %v2109 = vmul.f32 %v2108, 0.6931472
      %v2110 = vlog2.pop %v2068
      %v2111 = vmul.f32 %v2110, 0.6931472
      %v2112 = vlog2.pop %v2069
      %v2113 = vmul.f32 %v2112, 0.6931472
      %v2114 = vlog2.pop %v2070
      %v2115 = vmul.f32 %v2114, 0.6931472
      %v2116 = vlog2.pop %v2071
      %v2117 = vmul.f32 %v2116, 0.6931472
      %v2118 = vlog2.pop %v2072
      %v2119 = vmul.f32 %v2118, 0.6931472
      %v2120 = vlog2.pop %v2073
      %v2121 = vmul.f32 %v2120, 0.6931472
      %v2122 = vsub.f32 0.0, %v2075
      %v2123 = vsub.f32 0.0, %v2077
      %v2124 = vsub.f32 0.0, %v2079
      %v2125 = vsub.f32 0.0, %v2081
      %v2126 = vsub.f32 0.0, %v2083
      %v2127 = vsub.f32 0.0, %v2085
      %v2128 = vsub.f32 0.0, %v2087
      %v2129 = vsub.f32 0.0, %v2089
      %v2130 = vsub.f32 0.0, %v2091
      %v2131 = vsub.f32 0.0, %v2093
      %v2132 = vsub.f32 0.0, %v2095
      %v2133 = vsub.f32 0.0, %v2097
      %v2134 = vsub.f32 0.0, %v2099
      %v2135 = vsub.f32 0.0, %v2101
      %v2136 = vsub.f32 0.0, %v2103
      %v2137 = vsub.f32 0.0, %v2105
      %v2138 = vsub.f32 0.0, %v2107
      %v2139 = vsub.f32 0.0, %v2109
      %v2140 = vsub.f32 0.0, %v2111
      %v2141 = vsub.f32 0.0, %v2113
      %v2142 = vsub.f32 0.0, %v2115
      %v2143 = vsub.f32 0.0, %v2117
      %v2144 = vsub.f32 0.0, %v2119
      %v2145 = vsub.f32 0.0, %v2121
      %v2146 = vadd.f32 %v1275, %v2122
      %v2147 = vadd.f32 %v1276, %v2123
      %v2148 = vadd.f32 %v1277, %v2124
      %v2149 = vadd.f32 %v1278, %v2125
      %v2150 = vadd.f32 %v1279, %v2126
      %v2151 = vadd.f32 %v1280, %v2127
      %v2152 = vadd.f32 %v1281, %v2128
      %v2153 = vadd.f32 %v1282, %v2129
      %v2154 = vadd.f32 %v1283, %v2130
      %v2155 = vadd.f32 %v1284, %v2131
      %v2156 = vadd.f32 %v1285, %v2132
      %v2157 = vadd.f32 %v1286, %v2133
      %v2158 = vadd.f32 %v1287, %v2134
      %v2159 = vadd.f32 %v1288, %v2135
      %v2160 = vadd.f32 %v1289, %v2136
      %v2161 = vadd.f32 %v1290, %v2137
      %v2162 = vadd.f32 %v1291, %v2138
      %v2163 = vadd.f32 %v1292, %v2139
      %v2164 = vadd.f32 %v1293, %v2140
      %v2165 = vadd.f32 %v1294, %v2141
      %v2166 = vadd.f32 %v1295, %v2142
      %v2167 = vadd.f32 %v1296, %v2143
      %v2168 = vadd.f32 %v1297, %v2144
      %v2169 = vadd.f32 %v1298, %v2145
      %2170 = vmax.xlane.f32.xlu0 %v2146
      %v2171 = vpop.xlane.xlu0 %2170
      %2172 = vmax.xlane.f32.xlu0 %v2147
      %v2173 = vpop.xlane.xlu0 %2172
      %2174 = vmax.xlane.f32.xlu0 %v2148
      %v2175 = vpop.xlane.xlu0 %2174
      %2176 = vmax.xlane.f32.xlu0 %v2149
      %v2177 = vpop.xlane.xlu0 %2176
      %2178 = vmax.xlane.f32.xlu0 %v2150
      %v2179 = vpop.xlane.xlu0 %2178
      %2180 = vmax.xlane.f32.xlu0 %v2151
      %v2181 = vpop.xlane.xlu0 %2180
      %2182 = vmax.xlane.f32.xlu0 %v2152
      %v2183 = vpop.xlane.xlu0 %2182
      %2184 = vmax.xlane.f32.xlu0 %v2153
      %v2185 = vpop.xlane.xlu0 %2184
      %2186 = vmax.xlane.f32.xlu0 %v2154
      %v2187 = vpop.xlane.xlu0 %2186
      %2188 = vmax.xlane.f32.xlu0 %v2155
      %v2189 = vpop.xlane.xlu0 %2188
      %2190 = vmax.xlane.f32.xlu0 %v2156
      %v2191 = vpop.xlane.xlu0 %2190
      %2192 = vmax.xlane.f32.xlu0 %v2157
      %v2193 = vpop.xlane.xlu0 %2192
      %2194 = vmax.xlane.f32.xlu0 %v2158
      %v2195 = vpop.xlane.xlu0 %2194
      %2196 = vmax.xlane.f32.xlu0 %v2159
      %v2197 = vpop.xlane.xlu0 %2196
      %2198 = vmax.xlane.f32.xlu0 %v2160
      %v2199 = vpop.xlane.xlu0 %2198
      %2200 = vmax.xlane.f32.xlu0 %v2161
      %v2201 = vpop.xlane.xlu0 %2200
      %2202 = vmax.xlane.f32.xlu0 %v2162
      %v2203 = vpop.xlane.xlu0 %2202
      %2204 = vmax.xlane.f32.xlu0 %v2163
      %v2205 = vpop.xlane.xlu0 %2204
      %2206 = vmax.xlane.f32.xlu0 %v2164
      %v2207 = vpop.xlane.xlu0 %2206
      %2208 = vmax.xlane.f32.xlu0 %v2165
      %v2209 = vpop.xlane.xlu0 %2208
      %2210 = vmax.xlane.f32.xlu0 %v2166
      %v2211 = vpop.xlane.xlu0 %2210
      %2212 = vmax.xlane.f32.xlu0 %v2167
      %v2213 = vpop.xlane.xlu0 %2212
      %2214 = vmax.xlane.f32.xlu0 %v2168
      %v2215 = vpop.xlane.xlu0 %2214
      %2216 = vmax.xlane.f32.xlu0 %v2169
      %v2217 = vpop.xlane.xlu0 %2216
      %vm2218 = vcmp.eq.f32.partialorder %v2146, %v2171
      %vm2219 = vcmp.eq.f32.partialorder %v2147, %v2173
      %vm2220 = vcmp.eq.f32.partialorder %v2148, %v2175
      %vm2221 = vcmp.eq.f32.partialorder %v2149, %v2177
      %vm2222 = vcmp.eq.f32.partialorder %v2150, %v2179
      %vm2223 = vcmp.eq.f32.partialorder %v2151, %v2181
      %vm2224 = vcmp.eq.f32.partialorder %v2152, %v2183
      %vm2225 = vcmp.eq.f32.partialorder %v2153, %v2185
      %vm2226 = vcmp.eq.f32.partialorder %v2154, %v2187
      %vm2227 = vcmp.eq.f32.partialorder %v2155, %v2189
      %vm2228 = vcmp.eq.f32.partialorder %v2156, %v2191
      %vm2229 = vcmp.eq.f32.partialorder %v2157, %v2193
      %vm2230 = vcmp.eq.f32.partialorder %v2158, %v2195
      %vm2231 = vcmp.eq.f32.partialorder %v2159, %v2197
      %vm2232 = vcmp.eq.f32.partialorder %v2160, %v2199
      %vm2233 = vcmp.eq.f32.partialorder %v2161, %v2201
      %vm2234 = vcmp.eq.f32.partialorder %v2162, %v2203
      %vm2235 = vcmp.eq.f32.partialorder %v2163, %v2205
      %vm2236 = vcmp.eq.f32.partialorder %v2164, %v2207
      %vm2237 = vcmp.eq.f32.partialorder %v2165, %v2209
      %vm2238 = vcmp.eq.f32.partialorder %v2166, %v2211
      %vm2239 = vcmp.eq.f32.partialorder %v2167, %v2213
      %vm2240 = vcmp.eq.f32.partialorder %v2168, %v2215
      %vm2241 = vcmp.eq.f32.partialorder %v2169, %v2217
      %v2242 = vsel %vm2218, %v1273, 128
      %v2243 = vsel %vm2219, %v1273, 128
      %v2244 = vsel %vm2220, %v1273, 128
      %v2245 = vsel %vm2221, %v1273, 128
      %v2246 = vsel %vm2222, %v1273, 128
      %v2247 = vsel %vm2223, %v1273, 128
      %v2248 = vsel %vm2224, %v1273, 128
      %v2249 = vsel %vm2225, %v1273, 128
      %v2250 = vsel %vm2226, %v1273, 128
      %v2251 = vsel %vm2227, %v1273, 128
      %v2252 = vsel %vm2228, %v1273, 128
      %v2253 = vsel %vm2229, %v1273, 128
      %v2254 = vsel %vm2230, %v1273, 128
      %v2255 = vsel %vm2231, %v1273, 128
      %v2256 = vsel %vm2232, %v1273, 128
      %v2257 = vsel %vm2233, %v1273, 128
      %v2258 = vsel %vm2234, %v1273, 128
      %v2259 = vsel %vm2235, %v1273, 128
      %v2260 = vsel %vm2236, %v1273, 128
      %v2261 = vsel %vm2237, %v1273, 128
      %v2262 = vsel %vm2238, %v1273, 128
      %v2263 = vsel %vm2239, %v1273, 128
      %v2264 = vsel %vm2240, %v1273, 128
      %v2265 = vsel %vm2241, %v1273, 128
      %v2266 = vand.u32 %v2242, 65535
      %v2267 = vshra.s32 %v2242, 16
      %v2268 = vcvt.s32.f32 %v2266
      %v2269 = vcvt.s32.f32 %v2267
      %2270 = vmin.xlane.f32.xlu0 %v2269
      %v2271 = vpop.xlane.xlu0 %2270
      %vm2272 = vcmp.eq.f32.partialorder %v2269, %v2271
      %v2273 = vsel %vm2272, %v2268, inf
      %2274 = vmin.xlane.f32.xlu0 %v2273
      %v2275 = vpop.xlane.xlu0 %2274
      %v2276 = vcvt.f32.s32 %v2275
      %v2277 = vcvt.f32.s32 %v2271
      %v2278 = vshll.u32 %v2277, 16
      %v2279 = vadd.s32 %v2278, %v2276
      %v2280 = vand.u32 %v2243, 65535
      %v2281 = vshra.s32 %v2243, 16
      %v2282 = vcvt.s32.f32 %v2280
      %v2283 = vcvt.s32.f32 %v2281
      %2284 = vmin.xlane.f32.xlu0 %v2283
      %v2285 = vpop.xlane.xlu0 %2284
      %vm2286 = vcmp.eq.f32.partialorder %v2283, %v2285
      %v2287 = vsel %vm2286, %v2282, inf
      %2288 = vmin.xlane.f32.xlu0 %v2287
      %v2289 = vpop.xlane.xlu0 %2288
      %v2290 = vcvt.f32.s32 %v2289
      %v2291 = vcvt.f32.s32 %v2285
      %v2292 = vshll.u32 %v2291, 16
      %v2293 = vadd.s32 %v2292, %v2290
      %v2294 = vand.u32 %v2244, 65535
      %v2295 = vshra.s32 %v2244, 16
      %v2296 = vcvt.s32.f32 %v2294
      %v2297 = vcvt.s32.f32 %v2295
      %2298 = vmin.xlane.f32.xlu0 %v2297
      %v2299 = vpop.xlane.xlu0 %2298
      %vm2300 = vcmp.eq.f32.partialorder %v2297, %v2299
      %v2301 = vsel %vm2300, %v2296, inf
      %2302 = vmin.xlane.f32.xlu0 %v2301
      %v2303 = vpop.xlane.xlu0 %2302
      %v2304 = vcvt.f32.s32 %v2303
      %v2305 = vcvt.f32.s32 %v2299
      %v2306 = vshll.u32 %v2305, 16
      %v2307 = vadd.s32 %v2306, %v2304
      %v2308 = vand.u32 %v2245, 65535
      %v2309 = vshra.s32 %v2245, 16
      %v2310 = vcvt.s32.f32 %v2308
      %v2311 = vcvt.s32.f32 %v2309
      %2312 = vmin.xlane.f32.xlu0 %v2311
      %v2313 = vpop.xlane.xlu0 %2312
      %vm2314 = vcmp.eq.f32.partialorder %v2311, %v2313
      %v2315 = vsel %vm2314, %v2310, inf
      %2316 = vmin.xlane.f32.xlu0 %v2315
      %v2317 = vpop.xlane.xlu0 %2316
      %v2318 = vcvt.f32.s32 %v2317
      %v2319 = vcvt.f32.s32 %v2313
      %v2320 = vshll.u32 %v2319, 16
      %v2321 = vadd.s32 %v2320, %v2318
      %v2322 = vand.u32 %v2246, 65535
      %v2323 = vshra.s32 %v2246, 16
      %v2324 = vcvt.s32.f32 %v2322
      %v2325 = vcvt.s32.f32 %v2323
      %2326 = vmin.xlane.f32.xlu0 %v2325
      %v2327 = vpop.xlane.xlu0 %2326
      %vm2328 = vcmp.eq.f32.partialorder %v2325, %v2327
      %v2329 = vsel %vm2328, %v2324, inf
      %2330 = vmin.xlane.f32.xlu0 %v2329
      %v2331 = vpop.xlane.xlu0 %2330
      %v2332 = vcvt.f32.s32 %v2331
      %v2333 = vcvt.f32.s32 %v2327
      %v2334 = vshll.u32 %v2333, 16
      %v2335 = vadd.s32 %v2334, %v2332
      %v2336 = vand.u32 %v2247, 65535
      %v2337 = vshra.s32 %v2247, 16
      %v2338 = vcvt.s32.f32 %v2336
      %v2339 = vcvt.s32.f32 %v2337
      %2340 = vmin.xlane.f32.xlu0 %v2339
      %v2341 = vpop.xlane.xlu0 %2340
      %vm2342 = vcmp.eq.f32.partialorder %v2339, %v2341
      %v2343 = vsel %vm2342, %v2338, inf
      %2344 = vmin.xlane.f32.xlu0 %v2343
      %v2345 = vpop.xlane.xlu0 %2344
      %v2346 = vcvt.f32.s32 %v2345
      %v2347 = vcvt.f32.s32 %v2341
      %v2348 = vshll.u32 %v2347, 16
      %v2349 = vadd.s32 %v2348, %v2346
      %v2350 = vand.u32 %v2248, 65535
      %v2351 = vshra.s32 %v2248, 16
      %v2352 = vcvt.s32.f32 %v2350
      %v2353 = vcvt.s32.f32 %v2351
      %2354 = vmin.xlane.f32.xlu0 %v2353
      %v2355 = vpop.xlane.xlu0 %2354
      %vm2356 = vcmp.eq.f32.partialorder %v2353, %v2355
      %v2357 = vsel %vm2356, %v2352, inf
      %2358 = vmin.xlane.f32.xlu0 %v2357
      %v2359 = vpop.xlane.xlu0 %2358
      %v2360 = vcvt.f32.s32 %v2359
      %v2361 = vcvt.f32.s32 %v2355
      %v2362 = vshll.u32 %v2361, 16
      %v2363 = vadd.s32 %v2362, %v2360
      %v2364 = vand.u32 %v2249, 65535
      %v2365 = vshra.s32 %v2249, 16
      %v2366 = vcvt.s32.f32 %v2364
      %v2367 = vcvt.s32.f32 %v2365
      %2368 = vmin.xlane.f32.xlu0 %v2367
      %v2369 = vpop.xlane.xlu0 %2368
      %vm2370 = vcmp.eq.f32.partialorder %v2367, %v2369
      %v2371 = vsel %vm2370, %v2366, inf
      %2372 = vmin.xlane.f32.xlu0 %v2371
      %v2373 = vpop.xlane.xlu0 %2372
      %v2374 = vcvt.f32.s32 %v2373
      %v2375 = vcvt.f32.s32 %v2369
      %v2376 = vshll.u32 %v2375, 16
      %v2377 = vadd.s32 %v2376, %v2374
      %v2378 = vand.u32 %v2250, 65535
      %v2379 = vshra.s32 %v2250, 16
      %v2380 = vcvt.s32.f32 %v2378
      %v2381 = vcvt.s32.f32 %v2379
      %2382 = vmin.xlane.f32.xlu0 %v2381
      %v2383 = vpop.xlane.xlu0 %2382
      %vm2384 = vcmp.eq.f32.partialorder %v2381, %v2383
      %v2385 = vsel %vm2384, %v2380, inf
      %2386 = vmin.xlane.f32.xlu0 %v2385
      %v2387 = vpop.xlane.xlu0 %2386
      %v2388 = vcvt.f32.s32 %v2387
      %v2389 = vcvt.f32.s32 %v2383
      %v2390 = vshll.u32 %v2389, 16
      %v2391 = vadd.s32 %v2390, %v2388
      %v2392 = vand.u32 %v2251, 65535
      %v2393 = vshra.s32 %v2251, 16
      %v2394 = vcvt.s32.f32 %v2392
      %v2395 = vcvt.s32.f32 %v2393
      %2396 = vmin.xlane.f32.xlu0 %v2395
      %v2397 = vpop.xlane.xlu0 %2396
      %vm2398 = vcmp.eq.f32.partialorder %v2395, %v2397
      %v2399 = vsel %vm2398, %v2394, inf
      %2400 = vmin.xlane.f32.xlu0 %v2399
      %v2401 = vpop.xlane.xlu0 %2400
      %v2402 = vcvt.f32.s32 %v2401
      %v2403 = vcvt.f32.s32 %v2397
      %v2404 = vshll.u32 %v2403, 16
      %v2405 = vadd.s32 %v2404, %v2402
      %v2406 = vand.u32 %v2252, 65535
      %v2407 = vshra.s32 %v2252, 16
      %v2408 = vcvt.s32.f32 %v2406
      %v2409 = vcvt.s32.f32 %v2407
      %2410 = vmin.xlane.f32.xlu0 %v2409
      %v2411 = vpop.xlane.xlu0 %2410
      %vm2412 = vcmp.eq.f32.partialorder %v2409, %v2411
      %v2413 = vsel %vm2412, %v2408, inf
      %2414 = vmin.xlane.f32.xlu0 %v2413
      %v2415 = vpop.xlane.xlu0 %2414
      %v2416 = vcvt.f32.s32 %v2415
      %v2417 = vcvt.f32.s32 %v2411
      %v2418 = vshll.u32 %v2417, 16
      %v2419 = vadd.s32 %v2418, %v2416
      %v2420 = vand.u32 %v2253, 65535
      %v2421 = vshra.s32 %v2253, 16
      %v2422 = vcvt.s32.f32 %v2420
      %v2423 = vcvt.s32.f32 %v2421
      %2424 = vmin.xlane.f32.xlu0 %v2423
      %v2425 = vpop.xlane.xlu0 %2424
      %vm2426 = vcmp.eq.f32.partialorder %v2423, %v2425
      %v2427 = vsel %vm2426, %v2422, inf
      %2428 = vmin.xlane.f32.xlu0 %v2427
      %v2429 = vpop.xlane.xlu0 %2428
      %v2430 = vcvt.f32.s32 %v2429
      %v2431 = vcvt.f32.s32 %v2425
      %v2432 = vshll.u32 %v2431, 16
      %v2433 = vadd.s32 %v2432, %v2430
      %v2434 = vand.u32 %v2254, 65535
      %v2435 = vshra.s32 %v2254, 16
      %v2436 = vcvt.s32.f32 %v2434
      %v2437 = vcvt.s32.f32 %v2435
      %2438 = vmin.xlane.f32.xlu0 %v2437
      %v2439 = vpop.xlane.xlu0 %2438
      %vm2440 = vcmp.eq.f32.partialorder %v2437, %v2439
      %v2441 = vsel %vm2440, %v2436, inf
      %2442 = vmin.xlane.f32.xlu0 %v2441
      %v2443 = vpop.xlane.xlu0 %2442
      %v2444 = vcvt.f32.s32 %v2443
      %v2445 = vcvt.f32.s32 %v2439
      %v2446 = vshll.u32 %v2445, 16
      %v2447 = vadd.s32 %v2446, %v2444
      %v2448 = vand.u32 %v2255, 65535
      %v2449 = vshra.s32 %v2255, 16
      %v2450 = vcvt.s32.f32 %v2448
      %v2451 = vcvt.s32.f32 %v2449
      %2452 = vmin.xlane.f32.xlu0 %v2451
      %v2453 = vpop.xlane.xlu0 %2452
      %vm2454 = vcmp.eq.f32.partialorder %v2451, %v2453
      %v2455 = vsel %vm2454, %v2450, inf
      %2456 = vmin.xlane.f32.xlu0 %v2455
      %v2457 = vpop.xlane.xlu0 %2456
      %v2458 = vcvt.f32.s32 %v2457
      %v2459 = vcvt.f32.s32 %v2453
      %v2460 = vshll.u32 %v2459, 16
      %v2461 = vadd.s32 %v2460, %v2458
      %v2462 = vand.u32 %v2256, 65535
      %v2463 = vshra.s32 %v2256, 16
      %v2464 = vcvt.s32.f32 %v2462
      %v2465 = vcvt.s32.f32 %v2463
      %2466 = vmin.xlane.f32.xlu0 %v2465
      %v2467 = vpop.xlane.xlu0 %2466
      %vm2468 = vcmp.eq.f32.partialorder %v2465, %v2467
      %v2469 = vsel %vm2468, %v2464, inf
      %2470 = vmin.xlane.f32.xlu0 %v2469
      %v2471 = vpop.xlane.xlu0 %2470
      %v2472 = vcvt.f32.s32 %v2471
      %v2473 = vcvt.f32.s32 %v2467
      %v2474 = vshll.u32 %v2473, 16
      %v2475 = vadd.s32 %v2474, %v2472
      %v2476 = vand.u32 %v2257, 65535
      %v2477 = vshra.s32 %v2257, 16
      %v2478 = vcvt.s32.f32 %v2476
      %v2479 = vcvt.s32.f32 %v2477
      %2480 = vmin.xlane.f32.xlu0 %v2479
      %v2481 = vpop.xlane.xlu0 %2480
      %vm2482 = vcmp.eq.f32.partialorder %v2479, %v2481
      %v2483 = vsel %vm2482, %v2478, inf
      %2484 = vmin.xlane.f32.xlu0 %v2483
      %v2485 = vpop.xlane.xlu0 %2484
      %v2486 = vcvt.f32.s32 %v2485
      %v2487 = vcvt.f32.s32 %v2481
      %v2488 = vshll.u32 %v2487, 16
      %v2489 = vadd.s32 %v2488, %v2486
      %v2490 = vand.u32 %v2258, 65535
      %v2491 = vshra.s32 %v2258, 16
      %v2492 = vcvt.s32.f32 %v2490
      %v2493 = vcvt.s32.f32 %v2491
      %2494 = vmin.xlane.f32.xlu0 %v2493
      %v2495 = vpop.xlane.xlu0 %2494
      %vm2496 = vcmp.eq.f32.partialorder %v2493, %v2495
      %v2497 = vsel %vm2496, %v2492, inf
      %2498 = vmin.xlane.f32.xlu0 %v2497
      %v2499 = vpop.xlane.xlu0 %2498
      %v2500 = vcvt.f32.s32 %v2499
      %v2501 = vcvt.f32.s32 %v2495
      %v2502 = vshll.u32 %v2501, 16
      %v2503 = vadd.s32 %v2502, %v2500
      %v2504 = vand.u32 %v2259, 65535
      %v2505 = vshra.s32 %v2259, 16
      %v2506 = vcvt.s32.f32 %v2504
      %v2507 = vcvt.s32.f32 %v2505
      %2508 = vmin.xlane.f32.xlu0 %v2507
      %v2509 = vpop.xlane.xlu0 %2508
      %vm2510 = vcmp.eq.f32.partialorder %v2507, %v2509
      %v2511 = vsel %vm2510, %v2506, inf
      %2512 = vmin.xlane.f32.xlu0 %v2511
      %v2513 = vpop.xlane.xlu0 %2512
      %v2514 = vcvt.f32.s32 %v2513
      %v2515 = vcvt.f32.s32 %v2509
      %v2516 = vshll.u32 %v2515, 16
      %v2517 = vadd.s32 %v2516, %v2514
      %v2518 = vand.u32 %v2260, 65535
      %v2519 = vshra.s32 %v2260, 16
      %v2520 = vcvt.s32.f32 %v2518
      %v2521 = vcvt.s32.f32 %v2519
      %2522 = vmin.xlane.f32.xlu0 %v2521
      %v2523 = vpop.xlane.xlu0 %2522
      %vm2524 = vcmp.eq.f32.partialorder %v2521, %v2523
      %v2525 = vsel %vm2524, %v2520, inf
      %2526 = vmin.xlane.f32.xlu0 %v2525
      %v2527 = vpop.xlane.xlu0 %2526
      %v2528 = vcvt.f32.s32 %v2527
      %v2529 = vcvt.f32.s32 %v2523
      %v2530 = vshll.u32 %v2529, 16
      %v2531 = vadd.s32 %v2530, %v2528
      %v2532 = vand.u32 %v2261, 65535
      %v2533 = vshra.s32 %v2261, 16
      %v2534 = vcvt.s32.f32 %v2532
      %v2535 = vcvt.s32.f32 %v2533
      %2536 = vmin.xlane.f32.xlu0 %v2535
      %v2537 = vpop.xlane.xlu0 %2536
      %vm2538 = vcmp.eq.f32.partialorder %v2535, %v2537
      %v2539 = vsel %vm2538, %v2534, inf
      %2540 = vmin.xlane.f32.xlu0 %v2539
      %v2541 = vpop.xlane.xlu0 %2540
      %v2542 = vcvt.f32.s32 %v2541
      %v2543 = vcvt.f32.s32 %v2537
      %v2544 = vshll.u32 %v2543, 16
      %v2545 = vadd.s32 %v2544, %v2542
      %v2546 = vand.u32 %v2262, 65535
      %v2547 = vshra.s32 %v2262, 16
      %v2548 = vcvt.s32.f32 %v2546
      %v2549 = vcvt.s32.f32 %v2547
      %2550 = vmin.xlane.f32.xlu0 %v2549
      %v2551 = vpop.xlane.xlu0 %2550
      %vm2552 = vcmp.eq.f32.partialorder %v2549, %v2551
      %v2553 = vsel %vm2552, %v2548, inf
      %2554 = vmin.xlane.f32.xlu0 %v2553
      %v2555 = vpop.xlane.xlu0 %2554
      %v2556 = vcvt.f32.s32 %v2555
      %v2557 = vcvt.f32.s32 %v2551
      %v2558 = vshll.u32 %v2557, 16
      %v2559 = vadd.s32 %v2558, %v2556
      %v2560 = vand.u32 %v2263, 65535
      %v2561 = vshra.s32 %v2263, 16
      %v2562 = vcvt.s32.f32 %v2560
      %v2563 = vcvt.s32.f32 %v2561
      %2564 = vmin.xlane.f32.xlu0 %v2563
      %v2565 = vpop.xlane.xlu0 %2564
      %vm2566 = vcmp.eq.f32.partialorder %v2563, %v2565
      %v2567 = vsel %vm2566, %v2562, inf
      %2568 = vmin.xlane.f32.xlu0 %v2567
      %v2569 = vpop.xlane.xlu0 %2568
      %v2570 = vcvt.f32.s32 %v2569
      %v2571 = vcvt.f32.s32 %v2565
      %v2572 = vshll.u32 %v2571, 16
      %v2573 = vadd.s32 %v2572, %v2570
      %v2574 = vand.u32 %v2264, 65535
      %v2575 = vshra.s32 %v2264, 16
      %v2576 = vcvt.s32.f32 %v2574
      %v2577 = vcvt.s32.f32 %v2575
      %2578 = vmin.xlane.f32.xlu0 %v2577
      %v2579 = vpop.xlane.xlu0 %2578
      %vm2580 = vcmp.eq.f32.partialorder %v2577, %v2579
      %v2581 = vsel %vm2580, %v2576, inf
      %2582 = vmin.xlane.f32.xlu0 %v2581
      %v2583 = vpop.xlane.xlu0 %2582
      %v2584 = vcvt.f32.s32 %v2583
      %v2585 = vcvt.f32.s32 %v2579
      %v2586 = vshll.u32 %v2585, 16
      %v2587 = vadd.s32 %v2586, %v2584
      %v2588 = vand.u32 %v2265, 65535
      %v2589 = vshra.s32 %v2265, 16
      %v2590 = vcvt.s32.f32 %v2588
      %v2591 = vcvt.s32.f32 %v2589
      %2592 = vmin.xlane.f32.xlu0 %v2591
      %v2593 = vpop.xlane.xlu0 %2592
      %vm2594 = vcmp.eq.f32.partialorder %v2591, %v2593
      %v2595 = vsel %vm2594, %v2590, inf
      %2596 = vmin.xlane.f32.xlu0 %v2595
      %v2597 = vpop.xlane.xlu0 %2596
      %v2598 = vcvt.f32.s32 %v2597
      %v2599 = vcvt.f32.s32 %v2593
      %v2600 = vshll.u32 %v2599, 16
      %v2601 = vadd.s32 %v2600, %v2598
      %vm2602 = vcmp.eq.s32.totalorder %v1273, %v2279
      %vm2603 = vcmp.eq.s32.totalorder %v1273, %v2293
      %vm2604 = vcmp.eq.s32.totalorder %v1273, %v2307
      %vm2605 = vcmp.eq.s32.totalorder %v1273, %v2321
      %vm2606 = vcmp.eq.s32.totalorder %v1273, %v2335
      %vm2607 = vcmp.eq.s32.totalorder %v1273, %v2349
      %vm2608 = vcmp.eq.s32.totalorder %v1273, %v2363
      %vm2609 = vcmp.eq.s32.totalorder %v1273, %v2377
      %vm2610 = vcmp.eq.s32.totalorder %v1273, %v2391
      %vm2611 = vcmp.eq.s32.totalorder %v1273, %v2405
      %vm2612 = vcmp.eq.s32.totalorder %v1273, %v2419
      %vm2613 = vcmp.eq.s32.totalorder %v1273, %v2433
      %vm2614 = vcmp.eq.s32.totalorder %v1273, %v2447
      %vm2615 = vcmp.eq.s32.totalorder %v1273, %v2461
      %vm2616 = vcmp.eq.s32.totalorder %v1273, %v2475
      %vm2617 = vcmp.eq.s32.totalorder %v1273, %v2489
      %vm2618 = vcmp.eq.s32.totalorder %v1273, %v2503
      %vm2619 = vcmp.eq.s32.totalorder %v1273, %v2517
      %vm2620 = vcmp.eq.s32.totalorder %v1273, %v2531
      %vm2621 = vcmp.eq.s32.totalorder %v1273, %v2545
      %vm2622 = vcmp.eq.s32.totalorder %v1273, %v2559
      %vm2623 = vcmp.eq.s32.totalorder %v1273, %v2573
      %vm2624 = vcmp.eq.s32.totalorder %v1273, %v2587
      %vm2625 = vcmp.eq.s32.totalorder %v1273, %v2601
      %v2626 = vsel %vm2602, %v1420, 0.0
      %v2627 = vsel %vm2603, %v1421, 0.0
      %v2628 = vsel %vm2604, %v1422, 0.0
      %v2629 = vsel %vm2605, %v1423, 0.0
      %v2630 = vsel %vm2606, %v1424, 0.0
      %v2631 = vsel %vm2607, %v1425, 0.0
      %v2632 = vsel %vm2608, %v1426, 0.0
      %v2633 = vsel %vm2609, %v1427, 0.0
      %v2634 = vsel %vm2610, %v1428, 0.0
      %v2635 = vsel %vm2611, %v1429, 0.0
      %v2636 = vsel %vm2612, %v1430, 0.0
      %v2637 = vsel %vm2613, %v1431, 0.0
      %v2638 = vsel %vm2614, %v1432, 0.0
      %v2639 = vsel %vm2615, %v1433, 0.0
      %v2640 = vsel %vm2616, %v1434, 0.0
      %v2641 = vsel %vm2617, %v1435, 0.0
      %v2642 = vsel %vm2618, %v1436, 0.0
      %v2643 = vsel %vm2619, %v1437, 0.0
      %v2644 = vsel %vm2620, %v1438, 0.0
      %v2645 = vsel %vm2621, %v1439, 0.0
      %v2646 = vsel %vm2622, %v1440, 0.0
      %v2647 = vsel %vm2623, %v1441, 0.0
      %v2648 = vsel %vm2624, %v1442, 0.0
      %v2649 = vsel %vm2625, %v1443, 0.0
      %2650 = vadd.xlane.f32.xlu0 %v2626
      %v2651 = vpop.xlane.xlu0 %2650
      %2652 = vadd.xlane.f32.xlu0 %v2627
      %v2653 = vpop.xlane.xlu0 %2652
      %2654 = vadd.xlane.f32.xlu0 %v2628
      %v2655 = vpop.xlane.xlu0 %2654
      %2656 = vadd.xlane.f32.xlu0 %v2629
      %v2657 = vpop.xlane.xlu0 %2656
      %2658 = vadd.xlane.f32.xlu0 %v2630
      %v2659 = vpop.xlane.xlu0 %2658
      %2660 = vadd.xlane.f32.xlu0 %v2631
      %v2661 = vpop.xlane.xlu0 %2660
      %2662 = vadd.xlane.f32.xlu0 %v2632
      %v2663 = vpop.xlane.xlu0 %2662
      %2664 = vadd.xlane.f32.xlu0 %v2633
      %v2665 = vpop.xlane.xlu0 %2664
      %2666 = vadd.xlane.f32.xlu0 %v2634
      %v2667 = vpop.xlane.xlu0 %2666
      %2668 = vadd.xlane.f32.xlu0 %v2635
      %v2669 = vpop.xlane.xlu0 %2668
      %2670 = vadd.xlane.f32.xlu0 %v2636
      %v2671 = vpop.xlane.xlu0 %2670
      %2672 = vadd.xlane.f32.xlu0 %v2637
      %v2673 = vpop.xlane.xlu0 %2672
      %2674 = vadd.xlane.f32.xlu0 %v2638
      %v2675 = vpop.xlane.xlu0 %2674
      %2676 = vadd.xlane.f32.xlu0 %v2639
      %v2677 = vpop.xlane.xlu0 %2676
      %2678 = vadd.xlane.f32.xlu0 %v2640
      %v2679 = vpop.xlane.xlu0 %2678
      %2680 = vadd.xlane.f32.xlu0 %v2641
      %v2681 = vpop.xlane.xlu0 %2680
      %2682 = vadd.xlane.f32.xlu0 %v2642
      %v2683 = vpop.xlane.xlu0 %2682
      %2684 = vadd.xlane.f32.xlu0 %v2643
      %v2685 = vpop.xlane.xlu0 %2684
      %2686 = vadd.xlane.f32.xlu0 %v2644
      %v2687 = vpop.xlane.xlu0 %2686
      %2688 = vadd.xlane.f32.xlu0 %v2645
      %v2689 = vpop.xlane.xlu0 %2688
      %2690 = vadd.xlane.f32.xlu0 %v2646
      %v2691 = vpop.xlane.xlu0 %2690
      %2692 = vadd.xlane.f32.xlu0 %v2647
      %v2693 = vpop.xlane.xlu0 %2692
      %2694 = vadd.xlane.f32.xlu0 %v2648
      %v2695 = vpop.xlane.xlu0 %2694
      %2696 = vadd.xlane.f32.xlu0 %v2649
      %v2697 = vpop.xlane.xlu0 %2696
      %v2698 = vsub.f32 %v2651, %v1541
      %v2699 = vsub.f32 %v2653, %v1543
      %v2700 = vsub.f32 %v2655, %v1545
      %v2701 = vsub.f32 %v2657, %v1547
      %v2702 = vsub.f32 %v2659, %v1549
      %v2703 = vsub.f32 %v2661, %v1551
      %v2704 = vsub.f32 %v2663, %v1553
      %v2705 = vsub.f32 %v2665, %v1555
      %v2706 = vsub.f32 %v2667, %v1557
      %v2707 = vsub.f32 %v2669, %v1559
      %v2708 = vsub.f32 %v2671, %v1561
      %v2709 = vsub.f32 %v2673, %v1563
      %v2710 = vsub.f32 %v2675, %v1565
      %v2711 = vsub.f32 %v2677, %v1567
      %v2712 = vsub.f32 %v2679, %v1569
      %v2713 = vsub.f32 %v2681, %v1571
      %v2714 = vsub.f32 %v2683, %v1573
      %v2715 = vsub.f32 %v2685, %v1575
      %v2716 = vsub.f32 %v2687, %v1577
      %v2717 = vsub.f32 %v2689, %v1579
      %v2718 = vsub.f32 %v2691, %v1581
      %v2719 = vsub.f32 %v2693, %v1583
      %v2720 = vsub.f32 %v2695, %v1585
      %v2721 = vsub.f32 %v2697, %v1587
      %vm2722 = vcmp.eq.s32.totalorder %v1273, 0
      %v2723 = vcvt.s32.f32 %v2279
      %v2724 = vcvt.s32.f32 %v2293
      %v2725 = vcvt.s32.f32 %v2307
      %v2726 = vcvt.s32.f32 %v2321
      %v2727 = vcvt.s32.f32 %v2335
      %v2728 = vcvt.s32.f32 %v2349
      %v2729 = vcvt.s32.f32 %v2363
      %v2730 = vcvt.s32.f32 %v2377
      %v2731 = vcvt.s32.f32 %v2391
      %v2732 = vcvt.s32.f32 %v2405
      %v2733 = vcvt.s32.f32 %v2419
      %v2734 = vcvt.s32.f32 %v2433
      %v2735 = vcvt.s32.f32 %v2447
      %v2736 = vcvt.s32.f32 %v2461
      %v2737 = vcvt.s32.f32 %v2475
      %v2738 = vcvt.s32.f32 %v2489
      %v2739 = vcvt.s32.f32 %v2503
      %v2740 = vcvt.s32.f32 %v2517
      %v2741 = vcvt.s32.f32 %v2531
      %v2742 = vcvt.s32.f32 %v2545
      %v2743 = vcvt.s32.f32 %v2559
      %v2744 = vcvt.s32.f32 %v2573
      %v2745 = vcvt.s32.f32 %v2587
      %v2746 = vcvt.s32.f32 %v2601
      %vm2747 = vcmp.eq.s32.totalorder %v1273, 1
      %vm2748 = vcmp.eq.s32.totalorder %v1273, 2
      %v2749 = vsel %vm2748, %v2698, 0.0
      %v2750 = vsel %vm2748, %v2699, 0.0
      %v2751 = vsel %vm2748, %v2700, 0.0
      %v2752 = vsel %vm2748, %v2701, 0.0
      %v2753 = vsel %vm2748, %v2702, 0.0
      %v2754 = vsel %vm2748, %v2703, 0.0
      %v2755 = vsel %vm2748, %v2704, 0.0
      %v2756 = vsel %vm2748, %v2705, 0.0
      %v2757 = vsel %vm2748, %v2706, 0.0
      %v2758 = vsel %vm2748, %v2707, 0.0
      %v2759 = vsel %vm2748, %v2708, 0.0
      %v2760 = vsel %vm2748, %v2709, 0.0
      %v2761 = vsel %vm2748, %v2710, 0.0
      %v2762 = vsel %vm2748, %v2711, 0.0
      %v2763 = vsel %vm2748, %v2712, 0.0
      %v2764 = vsel %vm2748, %v2713, 0.0
      %v2765 = vsel %vm2748, %v2714, 0.0
      %v2766 = vsel %vm2748, %v2715, 0.0
      %v2767 = vsel %vm2748, %v2716, 0.0
      %v2768 = vsel %vm2748, %v2717, 0.0
      %v2769 = vsel %vm2748, %v2718, 0.0
      %v2770 = vsel %vm2748, %v2719, 0.0
      %v2771 = vsel %vm2748, %v2720, 0.0
      %v2772 = vsel %vm2748, %v2721, 0.0
      %v2773 = vsel %vm2747, %v1325, %v2749
      %v2774 = vsel %vm2747, %v1327, %v2750
      %v2775 = vsel %vm2747, %v1329, %v2751
      %v2776 = vsel %vm2747, %v1331, %v2752
      %v2777 = vsel %vm2747, %v1333, %v2753
      %v2778 = vsel %vm2747, %v1335, %v2754
      %v2779 = vsel %vm2747, %v1337, %v2755
      %v2780 = vsel %vm2747, %v1339, %v2756
      %v2781 = vsel %vm2747, %v1341, %v2757
      %v2782 = vsel %vm2747, %v1343, %v2758
      %v2783 = vsel %vm2747, %v1345, %v2759
      %v2784 = vsel %vm2747, %v1347, %v2760
      %v2785 = vsel %vm2747, %v1349, %v2761
      %v2786 = vsel %vm2747, %v1351, %v2762
      %v2787 = vsel %vm2747, %v1353, %v2763
      %v2788 = vsel %vm2747, %v1355, %v2764
      %v2789 = vsel %vm2747, %v1357, %v2765
      %v2790 = vsel %vm2747, %v1359, %v2766
      %v2791 = vsel %vm2747, %v1361, %v2767
      %v2792 = vsel %vm2747, %v1363, %v2768
      %v2793 = vsel %vm2747, %v1365, %v2769
      %v2794 = vsel %vm2747, %v1367, %v2770
      %v2795 = vsel %vm2747, %v1369, %v2771
      %v2796 = vsel %vm2747, %v1371, %v2772
      %v2797 = vsel %vm2722, %v2723, %v2773
      %v2798 = vsel %vm2722, %v2724, %v2774
      %v2799 = vsel %vm2722, %v2725, %v2775
      %v2800 = vsel %vm2722, %v2726, %v2776
      %v2801 = vsel %vm2722, %v2727, %v2777
      %v2802 = vsel %vm2722, %v2728, %v2778
      %v2803 = vsel %vm2722, %v2729, %v2779
      %v2804 = vsel %vm2722, %v2730, %v2780
      %v2805 = vsel %vm2722, %v2731, %v2781
      %v2806 = vsel %vm2722, %v2732, %v2782
      %v2807 = vsel %vm2722, %v2733, %v2783
      %v2808 = vsel %vm2722, %v2734, %v2784
      %v2809 = vsel %vm2722, %v2735, %v2785
      %v2810 = vsel %vm2722, %v2736, %v2786
      %v2811 = vsel %vm2722, %v2737, %v2787
      %v2812 = vsel %vm2722, %v2738, %v2788
      %v2813 = vsel %vm2722, %v2739, %v2789
      %v2814 = vsel %vm2722, %v2740, %v2790
      %v2815 = vsel %vm2722, %v2741, %v2791
      %v2816 = vsel %vm2722, %v2742, %v2792
      %v2817 = vsel %vm2722, %v2743, %v2793
      %v2818 = vsel %vm2722, %v2744, %v2794
      %v2819 = vsel %vm2722, %v2745, %v2795
      %v2820 = vsel %vm2722, %v2746, %v2796
      %vm2821 = vcmask 64512
      %2822 = vst.msk [vmem:[%s336] sm:$0xff] %vm2821, %v2797
      %2823 = vst.msk [vmem:[%s336 + $0x8] sm:$0xff] %vm2821, %v2798
      %2824 = vst.msk [vmem:[%s336 + $0x10] sm:$0xff] %vm2821, %v2799
      %2825 = vst.msk [vmem:[%s336 + $0x18] sm:$0xff] %vm2821, %v2800
      %2826 = vst.msk [vmem:[%s336 + $0x20] sm:$0xff] %vm2821, %v2801
      %2827 = vst.msk [vmem:[%s336 + $0x28] sm:$0xff] %vm2821, %v2802
      %2828 = vst.msk [vmem:[%s336 + $0x30] sm:$0xff] %vm2821, %v2803
      %2829 = vst.msk [vmem:[%s336 + $0x38] sm:$0xff] %vm2821, %v2804
      %2830 = vst.msk [vmem:[%s336 + $0x40] sm:$0xff] %vm2821, %v2805
      %2831 = vst.msk [vmem:[%s336 + $0x48] sm:$0xff] %vm2821, %v2806
      %2832 = vst.msk [vmem:[%s336 + $0x50] sm:$0xff] %vm2821, %v2807
      %2833 = vst.msk [vmem:[%s336 + $0x58] sm:$0xff] %vm2821, %v2808
      %2834 = vst.msk [vmem:[%s336 + $0x60] sm:$0xff] %vm2821, %v2809
      %2835 = vst.msk [vmem:[%s336 + $0x68] sm:$0xff] %vm2821, %v2810
      %2836 = vst.msk [vmem:[%s336 + $0x70] sm:$0xff] %vm2821, %v2811
      %2837 = vst.msk [vmem:[%s336 + $0x78] sm:$0xff] %vm2821, %v2812
      %2838 = vst.msk [vmem:[%s336 + $0x80] sm:$0xff] %vm2821, %v2813
      %2839 = vst.msk [vmem:[%s336 + $0x88] sm:$0xff] %vm2821, %v2814
      %2840 = vst.msk [vmem:[%s336 + $0x90] sm:$0xff] %vm2821, %v2815
      %2841 = vst.msk [vmem:[%s336 + $0x98] sm:$0xff] %vm2821, %v2816
      %2842 = vst.msk [vmem:[%s336 + $0xa0] sm:$0xff] %vm2821, %v2817
      %2843 = vst.msk [vmem:[%s336 + $0xa8] sm:$0xff] %vm2821, %v2818
      %2844 = vst.msk [vmem:[%s336 + $0xb0] sm:$0xff] %vm2821, %v2819
      %2845 = vst.msk [vmem:[%s336 + $0xb8] sm:$0xff] %vm2821, %v2820
      %s2846 = smul.u32 24, %s22
      %p2847 = scmp.lt.s32.totalorder %s2846, 47
      %s2848 = scalar_select %p2847, %s2846, 47
      %s2849 = smul.addr %s2848, 8
      %s2850 = scalar_lea.vmem %s10, %s2849
      // Predicated region
      $region57: #{actor_critic_forward.1} parent=55 // pred_check
        %p2851 = pneg %p234
      $region58: #{actor_critic_forward.1} parent=55 // pred_check_branch
        %2853 = sbr.rel (%p2851) target = $region60
      $region59: #{actor_critic_forward.1} parent=55 // pred_region
        %s2854 = smul.u32 24, %s22
      $region60: #{actor_critic_forward.1} parent=55 // pred_fallthru
        _
    $region56: #{actor_critic_forward.1} parent=5 // pred_fallthru
      _
    %p2855 = scmp.le.s32.totalorder 2, %s17
    // Predicated region
    $region61: #{actor_critic_forward.1} parent=5 // pred_check
      %p2856 = pneg %p2855
    $region62: #{actor_critic_forward.1} parent=5 // pred_check_branch
      %2858 = sbr.rel (%p2856) target = $region64
    $region63: #{actor_critic_forward.1} parent=5 // pred_region
      %s2859 = ssub.s32 %s17, 2
      // Predicated region
      $region65: #{actor_critic_forward.1} parent=63 // pred_check
        %p2860 = pneg %p240
      $region66: #{actor_critic_forward.1} parent=63 // pred_check_branch
        %2862 = sbr.rel (%p2860) target = $region68
      $region67: #{actor_critic_forward.1} parent=63 // pred_region
        %s2863 = smul.u32 24, %s23
        %p2864 = scmp.lt.s32.totalorder %s2863, 47
        %s2865 = scalar_select %p2864, %s2863, 47
        %s2866 = smul.addr %s2865, 8
        %s2867 = scalar_lea.vmem %s10, %s2866
      $region68: #{actor_critic_forward.1} parent=63 // pred_fallthru
        _
    $region64: #{actor_critic_forward.1} parent=5 // pred_fallthru
      _
  $region6: #{actor_critic_forward.1} parent=0 // loop_footer
    %s21 = sadd.s32 1, %s17
  $region7: #{actor_critic_forward.1} parent=0 // loop_footer_branch
    %16 = sbr.rel target = $region3
  $region8: #{actor_critic_forward.1} parent=0 // loop_exit
    _

</llo_original>
